<compile_context>
chip_gen: v6e
topology: v6e:2x2x1
jax: 0.10.0
libtpu: 0.0.40
codegen_flags: <defaults>
</compile_context>

<pallas_src>
import functools

import jax
import jax.numpy as jnp
import numpy as np
from jax.experimental import pallas as pl
from jax.experimental.pallas import tpu as pltpu


# ----------------------------- Pallas kernel -------------------------------

def make_fused_lstm_kernel(seq_len, b_pad, hidden_dim, num_layers):
    """Builds the fused kernel closure for fixed static shapes."""
    H, B, S, L = hidden_dim, b_pad, seq_len, num_layers

    def kernel(*refs):
        # refs layout:
        #   x2d (S*B, D)
        #   layer 0:   wih0 (D, 4H), whh0 (H, 4H), b0 (1, 4H)
        #   layer l>0: wcat_l (2H, 4H)  [= concat(W_ih_l, W_hh_l)], b_l (1, 4H)
        #   w_reg (H, O), b_reg (1, O)
        #   out (B, O)
        idx = 0
        x_ref = refs[idx]; idx += 1
        wih0_ref, whh0_ref, b0_ref = refs[idx], refs[idx + 1], refs[idx + 2]
        idx += 3
        wcat_refs, bcat_refs = [], []
        for _ in range(1, L):
            wcat_refs.append(refs[idx]); bcat_refs.append(refs[idx + 1])
            idx += 2
        wreg_ref, breg_ref, out_ref = refs[idx], refs[idx + 1], refs[idx + 2]

        # Lane mask selecting the "g" gate block (PyTorch gate order i,f,g,o).
        lane = jax.lax.broadcasted_iota(jnp.int32, (B, 4 * H), 1)
        is_g = (lane >= 2 * H) & (lane < 3 * H)
        # Single-tanh activation constants (hoisted out of the recurrence):
        #   g-lanes:      tanh(x)
        #   i/f/o-lanes:  sigmoid(x) = 0.5 * (1 + tanh(0.5 * x))
        act_scale = jnp.where(is_g, 1.0, 0.5).astype(jnp.float32)
        act_off = jnp.where(is_g, 0.0, 0.5).astype(jnp.float32)

        # Hoisted layer-0 input projection with bias folded in (one matmul).
        gates_x0 = jnp.dot(x_ref[...], wih0_ref[...],
                           preferred_element_type=jnp.float32) + b0_ref[...]
        whh0 = whh0_ref[...]
        wcats = [r[...] for r in wcat_refs]
        bcats = [r[...] for r in bcat_refs]

        zeros = jnp.zeros((B, H), jnp.float32)
        h = [zeros] * L
        c = [zeros] * L

        def lstm_cell(gates, c_prev):
            # ONE full-vreg tanh + VPU scale/offset fixup for all 4 gates.
            t_all = jnp.tanh(gates * act_scale)
            acts = t_all * act_scale + act_off
            i_g = acts[:, 0 * H:1 * H]
            f_g = acts[:, 1 * H:2 * H]
            g_g = acts[:, 2 * H:3 * H]
            o_g = acts[:, 3 * H:4 * H]
            c_new = f_g * c_prev + i_g * g_g
            h_new = o_g * jnp.tanh(c_new)
            return h_new, c_new

        # Wavefront schedule: wavefront w computes layer l at time t = w - l.
        # Within a wavefront all active layers are independent chains: layer l
        # reads layer l-1's output produced in the previous wavefront.
        # (S is small here -> fully unrolled static loop; see TODO above.)
        for w in range(S + L - 1):
            new_h, new_c = list(h), list(c)
            for l in range(L):
                t_step = w - l
                if not (0 <= t_step < S):
                    continue
                if l == 0:
                    gates = gates_x0[t_step * B:(t_step + 1) * B, :] + jnp.dot(
                        h[0], whh0, preferred_element_type=jnp.float32)
                else:
                    # Fused input+recurrent matmul: [h_{l-1,t} ; h_{l,t-1}]
                    hin = jnp.concatenate([h[l - 1], h[l]], axis=1)  # (B, 2H)
                    gates = jnp.dot(hin, wcats[l - 1],
                                    preferred_element_type=jnp.float32
                                    ) + bcats[l - 1]
                new_h[l], new_c[l] = lstm_cell(gates, c[l])
            h, c = new_h, new_c

        # Final regressor on the last hidden state (dropout = identity).
        out_ref[...] = (jnp.dot(h[L - 1], wreg_ref[...],
                                preferred_element_type=jnp.float32)
                        + breg_ref[...])

    return kernel


# ------------------------------ Wrappers ------------------------------------

def _run_fused_lstm(x, params, num_layers, hidden_dim):
    S, Bn, D = x.shape
    H = hidden_dim
    B_pad = int(-(-Bn // 8) * 8)                 # pad batch to f32 sublanes
    x_pad = jnp.pad(x, ((0, 0), (0, B_pad - Bn), (0, 0)))
    x2d = x_pad.reshape(S * B_pad, D)            # time-major, batch-minor

    wih0_t, whh0_t, b0 = params["lstm"][0]
    flat_inputs = [x2d, wih0_t, whh0_t, b0]
    for l in range(1, num_layers):
        wih_t, whh_t, b = params["lstm"][l]
        # Pre-concatenate [W_ih_l ; W_hh_l] for the fused (B,2H)@(2H,4H) dot.
        w_cat = jnp.concatenate([wih_t, whh_t], axis=0)   # (2H, 4H)
        flat_inputs += [w_cat, b]
    w_reg, b_reg = params["regressor"]
    flat_inputs += [w_reg, b_reg]
    out_dim = w_reg.shape[1]

    vmem_spec = pl.BlockSpec(memory_space=pltpu.MemorySpace.VMEM)
    kernel = make_fused_lstm_kernel(S, B_pad, H, num_layers)
    y_pad = pl.pallas_call(
        kernel,
        out_shape=jax.ShapeDtypeStruct((B_pad, out_dim), jnp.float32),
        grid=(),
        in_specs=[vmem_spec] * len(flat_inputs),
        out_specs=vmem_spec,
    )(*flat_inputs)
    return y_pad[:Bn]


@functools.partial(jax.jit, static_argnums=(2, 3))
def lstm_forward(x, params, num_layers, hidden_dim):
    """Full forward pass of the LSTM module (inference semantics)."""
    return _run_fused_lstm(x, params, num_layers, hidden_dim)


# ----------------------- deterministic parameter init ----------------------

def init_params(key, input_dim, hidden_dim, output_dim, num_layers):
    params = {"lstm": []}
    k = 1.0 / np.sqrt(hidden_dim)
    for l in range(num_layers):
        d_in = input_dim if l == 0 else hidden_dim
        key, k1, k2, k3, k4 = jax.random.split(key, 5)
        w_ih = jax.random.uniform(k1, (4 * hidden_dim, d_in), jnp.float32, -k, k)
        w_hh = jax.random.uniform(k2, (4 * hidden_dim, hidden_dim), jnp.float32, -k, k)
        b_ih = jax.random.uniform(k3, (4 * hidden_dim,), jnp.float32, -k, k)
        b_hh = jax.random.uniform(k4, (4 * hidden_dim,), jnp.float32, -k, k)
        params["lstm"].append(
            (w_ih.T, w_hh.T, (b_ih + b_hh).reshape(1, 4 * hidden_dim)))
    kl = 1.0 / np.sqrt(hidden_dim)
    key, k1, k2 = jax.random.split(key, 3)
    w = jax.random.uniform(k1, (output_dim, hidden_dim), jnp.float32, -kl, kl)
    b = jax.random.uniform(k2, (output_dim,), jnp.float32, -kl, kl)
    params["regressor"] = (w.T, b.reshape(1, output_dim))
    return params


# --------------------------- pure-JAX reference -----------------------------

def lstm_forward_ref(x, params, num_layers, hidden_dim):
    layer_in = x
    for l in range(num_layers):
        wih_t, whh_t, b = params["lstm"][l]
        B = layer_in.shape[1]
        h = jnp.zeros((B, hidden_dim), jnp.float32)
        c = jnp.zeros((B, hidden_dim), jnp.float32)

        def step(carry, x_t):
            h, c = carry
            gates = x_t @ wih_t + h @ whh_t + b
            i, f, g, o = jnp.split(gates, 4, axis=-1)
            c = jax.nn.sigmoid(f) * c + jax.nn.sigmoid(i) * jnp.tanh(g)
            h = jax.nn.sigmoid(o) * jnp.tanh(c)
            return (h, c), h

        _, outs = jax.lax.scan(step, (h, c), layer_in)
        layer_in = outs
    w_t, b = params["regressor"]
    return layer_in[-1] @ w_t + b


# --------------------------------- main -------------------------------------

if __name__ == "__main__":
    # Module hyperparameters (small, consistent with the forward pass).
    input_dim, hidden_dim, output_dim = 16, 32, 8
    num_layers, batch_size = 2, 4
    seq_len = 8
    dropout, use_bn = 0.0, False  # inference semantics

    key = jax.random.PRNGKey(0)
    key, pkey, xkey = jax.random.split(key, 3)
    params = init_params(pkey, input_dim, hidden_dim, output_dim, num_layers)

    # x: (seq_len, batch, input_dim) — PyTorch nn.LSTM default layout.
    x = jax.random.normal(xkey, (seq_len, batch_size, input_dim), jnp.float32)

    y = lstm_forward(x, params, num_layers, hidden_dim)
    y = jax.block_until_ready(y)

    y_ref = jax.block_until_ready(lstm_forward_ref(x, params, num_layers, hidden_dim))
    np.testing.assert_allclose(np.asarray(y), np.asarray(y_ref),
                               rtol=1e-5, atol=1e-5)

    print("KERNEL_OK")
</pallas_src>

<mosaic_0001>
module attributes {stable_mosaic.version = 11 : i64} {
  func.func @kernel(%arg0: memref<64x16xf32, #tpu.memory_space<vmem>>, %arg1: memref<16x128xf32, #tpu.memory_space<vmem>>, %arg2: memref<32x128xf32, #tpu.memory_space<vmem>>, %arg3: memref<1x128xf32, #tpu.memory_space<vmem>>, %arg4: memref<64x128xf32, #tpu.memory_space<vmem>>, %arg5: memref<1x128xf32, #tpu.memory_space<vmem>>, %arg6: memref<32x8xf32, #tpu.memory_space<vmem>>, %arg7: memref<1x8xf32, #tpu.memory_space<vmem>>, %arg8: memref<8x8xf32, #tpu.memory_space<vmem>>) attributes {dimension_semantics = [], scalar_prefetch = 0 : i64, scratch_operands = 0 : i64, tpu.core_type = #tpu.core_type<tc>} {
    %0 = tpu.iota {dimensions = array<i32: 1>} : vector<8x128xi32>
    %c64_i32 = arith.constant 64 : i32
    %1 = vector.broadcast %c64_i32 : i32 to vector<8x128xi32>
    %2 = arith.cmpi sge, %0, %1 : vector<8x128xi32>
    %c96_i32 = arith.constant 96 : i32
    %3 = vector.broadcast %c96_i32 : i32 to vector<8x128xi32>
    %4 = arith.cmpi slt, %0, %3 : vector<8x128xi32>
    %5 = arith.andi %2, %4 : vector<8x128xi1>
    %cst = arith.constant 1.000000e+00 : f32
    %cst_0 = arith.constant 5.000000e-01 : f32
    %6 = vector.broadcast %cst : f32 to vector<8x128xf32>
    %7 = vector.broadcast %cst_0 : f32 to vector<8x128xf32>
    %8 = arith.select %5, %6, %7 : vector<8x128xi1>, vector<8x128xf32>
    %cst_1 = arith.constant 0.000000e+00 : f32
    %cst_2 = arith.constant 5.000000e-01 : f32
    %9 = vector.broadcast %cst_1 : f32 to vector<8x128xf32>
    %10 = vector.broadcast %cst_2 : f32 to vector<8x128xf32>
    %11 = arith.select %5, %9, %10 : vector<8x128xi1>, vector<8x128xf32>
    %c0 = arith.constant 0 : index
    %c0_3 = arith.constant 0 : index
    %12 = vector.load %arg0[%c0, %c0_3] : memref<64x16xf32, #tpu.memory_space<vmem>>, vector<64x16xf32>
    %c0_4 = arith.constant 0 : index
    %c0_5 = arith.constant 0 : index
    %13 = vector.load %arg1[%c0_4, %c0_5] : memref<16x128xf32, #tpu.memory_space<vmem>>, vector<16x128xf32>
    %cst_6 = arith.constant dense<0.000000e+00> : vector<64x128xf32>
    %14 = tpu.matmul %12, %13, %cst_6 {dimension_numbers = #tpu.dot_dimension_numbers<[1], [0], [0], [1], [0, 0, 1, 1], [], []>} : vector<64x16xf32>, vector<16x128xf32>, vector<64x128xf32> -> vector<64x128xf32>
    %c0_7 = arith.constant 0 : index
    %c0_8 = arith.constant 0 : index
    %15 = vector.load %arg3[%c0_7, %c0_8] : memref<1x128xf32, #tpu.memory_space<vmem>>, vector<1x128xf32>
    %16 = vector.broadcast %15 : vector<1x128xf32> to vector<64x128xf32>
    %17 = arith.addf %14, %16 : vector<64x128xf32>
    %c0_9 = arith.constant 0 : index
    %c0_10 = arith.constant 0 : index
    %18 = vector.load %arg2[%c0_9, %c0_10] : memref<32x128xf32, #tpu.memory_space<vmem>>, vector<32x128xf32>
    %c0_11 = arith.constant 0 : index
    %c0_12 = arith.constant 0 : index
    %19 = vector.load %arg4[%c0_11, %c0_12] : memref<64x128xf32, #tpu.memory_space<vmem>>, vector<64x128xf32>
    %c0_13 = arith.constant 0 : index
    %c0_14 = arith.constant 0 : index
    %20 = vector.load %arg5[%c0_13, %c0_14] : memref<1x128xf32, #tpu.memory_space<vmem>>, vector<1x128xf32>
    %cst_15 = arith.constant 0.000000e+00 : f32
    %21 = vector.broadcast %cst_15 : f32 to vector<8x32xf32>
    %22 = vector.extract_strided_slice %17 {offsets = [0, 0], sizes = [8, 128], strides = [1, 1]} : vector<64x128xf32> to vector<8x128xf32>
    %cst_16 = arith.constant dense<0.000000e+00> : vector<8x128xf32>
    %23 = tpu.matmul %21, %18, %cst_16 {dimension_numbers = #tpu.dot_dimension_numbers<[1], [0], [0], [1], [0, 0, 1, 1], [], []>} : vector<8x32xf32>, vector<32x128xf32>, vector<8x128xf32> -> vector<8x128xf32>
    %24 = arith.addf %22, %23 : vector<8x128xf32>
    %25 = arith.mulf %24, %8 : vector<8x128xf32>
    %26 = math.tanh %25 : vector<8x128xf32>
    %27 = arith.mulf %26, %8 : vector<8x128xf32>
    %28 = arith.addf %27, %11 : vector<8x128xf32>
    %29 = vector.extract_strided_slice %28 {offsets = [0, 0], sizes = [8, 32], strides = [1, 1]} : vector<8x128xf32> to vector<8x32xf32>
    %30 = vector.extract_strided_slice %28 {offsets = [0, 32], sizes = [8, 32], strides = [1, 1]} : vector<8x128xf32> to vector<8x32xf32>
    %31 = vector.extract_strided_slice %28 {offsets = [0, 64], sizes = [8, 32], strides = [1, 1]} : vector<8x128xf32> to vector<8x32xf32>
    %32 = vector.extract_strided_slice %28 {offsets = [0, 96], sizes = [8, 32], strides = [1, 1]} : vector<8x128xf32> to vector<8x32xf32>
    %33 = arith.mulf %30, %21 : vector<8x32xf32>
    %34 = arith.mulf %29, %31 : vector<8x32xf32>
    %35 = arith.addf %33, %34 : vector<8x32xf32>
    %36 = math.tanh %35 : vector<8x32xf32>
    %37 = arith.mulf %32, %36 : vector<8x32xf32>
    %38 = vector.extract_strided_slice %17 {offsets = [8, 0], sizes = [8, 128], strides = [1, 1]} : vector<64x128xf32> to vector<8x128xf32>
    %cst_17 = arith.constant dense<0.000000e+00> : vector<8x128xf32>
    %39 = tpu.matmul %37, %18, %cst_17 {dimension_numbers = #tpu.dot_dimension_numbers<[1], [0], [0], [1], [0, 0, 1, 1], [], []>} : vector<8x32xf32>, vector<32x128xf32>, vector<8x128xf32> -> vector<8x128xf32>
    %40 = arith.addf %38, %39 : vector<8x128xf32>
    %41 = arith.mulf %40, %8 : vector<8x128xf32>
    %42 = math.tanh %41 : vector<8x128xf32>
    %43 = arith.mulf %42, %8 : vector<8x128xf32>
    %44 = arith.addf %43, %11 : vector<8x128xf32>
    %45 = vector.extract_strided_slice %44 {offsets = [0, 0], sizes = [8, 32], strides = [1, 1]} : vector<8x128xf32> to vector<8x32xf32>
    %46 = vector.extract_strided_slice %44 {offsets = [0, 32], sizes = [8, 32], strides = [1, 1]} : vector<8x128xf32> to vector<8x32xf32>
    %47 = vector.extract_strided_slice %44 {offsets = [0, 64], sizes = [8, 32], strides = [1, 1]} : vector<8x128xf32> to vector<8x32xf32>
    %48 = vector.extract_strided_slice %44 {offsets = [0, 96], sizes = [8, 32], strides = [1, 1]} : vector<8x128xf32> to vector<8x32xf32>
    %49 = arith.mulf %46, %35 : vector<8x32xf32>
    %50 = arith.mulf %45, %47 : vector<8x32xf32>
    %51 = arith.addf %49, %50 : vector<8x32xf32>
    %52 = math.tanh %51 : vector<8x32xf32>
    %53 = arith.mulf %48, %52 : vector<8x32xf32>
    %54 = tpu.concatenate %37, %21 in 1 : vector<8x32xf32>, vector<8x32xf32> -> vector<8x64xf32>
    %cst_18 = arith.constant dense<0.000000e+00> : vector<8x128xf32>
    %55 = tpu.matmul %54, %19, %cst_18 {dimension_numbers = #tpu.dot_dimension_numbers<[1], [0], [0], [1], [0, 0, 1, 1], [], []>} : vector<8x64xf32>, vector<64x128xf32>, vector<8x128xf32> -> vector<8x128xf32>
    %56 = vector.broadcast %20 : vector<1x128xf32> to vector<8x128xf32>
    %57 = arith.addf %55, %56 : vector<8x128xf32>
    %58 = arith.mulf %57, %8 : vector<8x128xf32>
    %59 = math.tanh %58 : vector<8x128xf32>
    %60 = arith.mulf %59, %8 : vector<8x128xf32>
    %61 = arith.addf %60, %11 : vector<8x128xf32>
    %62 = vector.extract_strided_slice %61 {offsets = [0, 0], sizes = [8, 32], strides = [1, 1]} : vector<8x128xf32> to vector<8x32xf32>
    %63 = vector.extract_strided_slice %61 {offsets = [0, 32], sizes = [8, 32], strides = [1, 1]} : vector<8x128xf32> to vector<8x32xf32>
    %64 = vector.extract_strided_slice %61 {offsets = [0, 64], sizes = [8, 32], strides = [1, 1]} : vector<8x128xf32> to vector<8x32xf32>
    %65 = vector.extract_strided_slice %61 {offsets = [0, 96], sizes = [8, 32], strides = [1, 1]} : vector<8x128xf32> to vector<8x32xf32>
    %66 = arith.mulf %63, %21 : vector<8x32xf32>
    %67 = arith.mulf %62, %64 : vector<8x32xf32>
    %68 = arith.addf %66, %67 : vector<8x32xf32>
    %69 = math.tanh %68 : vector<8x32xf32>
    %70 = arith.mulf %65, %69 : vector<8x32xf32>
    %71 = vector.extract_strided_slice %17 {offsets = [16, 0], sizes = [8, 128], strides = [1, 1]} : vector<64x128xf32> to vector<8x128xf32>
    %cst_19 = arith.constant dense<0.000000e+00> : vector<8x128xf32>
    %72 = tpu.matmul %53, %18, %cst_19 {dimension_numbers = #tpu.dot_dimension_numbers<[1], [0], [0], [1], [0, 0, 1, 1], [], []>} : vector<8x32xf32>, vector<32x128xf32>, vector<8x128xf32> -> vector<8x128xf32>
    %73 = arith.addf %71, %72 : vector<8x128xf32>
    %74 = arith.mulf %73, %8 : vector<8x128xf32>
    %75 = math.tanh %74 : vector<8x128xf32>
    %76 = arith.mulf %75, %8 : vector<8x128xf32>
    %77 = arith.addf %76, %11 : vector<8x128xf32>
    %78 = vector.extract_strided_slice %77 {offsets = [0, 0], sizes = [8, 32], strides = [1, 1]} : vector<8x128xf32> to vector<8x32xf32>
    %79 = vector.extract_strided_slice %77 {offsets = [0, 32], sizes = [8, 32], strides = [1, 1]} : vector<8x128xf32> to vector<8x32xf32>
    %80 = vector.extract_strided_slice %77 {offsets = [0, 64], sizes = [8, 32], strides = [1, 1]} : vector<8x128xf32> to vector<8x32xf32>
    %81 = vector.extract_strided_slice %77 {offsets = [0, 96], sizes = [8, 32], strides = [1, 1]} : vector<8x128xf32> to vector<8x32xf32>
    %82 = arith.mulf %79, %51 : vector<8x32xf32>
    %83 = arith.mulf %78, %80 : vector<8x32xf32>
    %84 = arith.addf %82, %83 : vector<8x32xf32>
    %85 = math.tanh %84 : vector<8x32xf32>
    %86 = arith.mulf %81, %85 : vector<8x32xf32>
    %87 = tpu.concatenate %53, %70 in 1 : vector<8x32xf32>, vector<8x32xf32> -> vector<8x64xf32>
    %cst_20 = arith.constant dense<0.000000e+00> : vector<8x128xf32>
    %88 = tpu.matmul %87, %19, %cst_20 {dimension_numbers = #tpu.dot_dimension_numbers<[1], [0], [0], [1], [0, 0, 1, 1], [], []>} : vector<8x64xf32>, vector<64x128xf32>, vector<8x128xf32> -> vector<8x128xf32>
    %89 = vector.broadcast %20 : vector<1x128xf32> to vector<8x128xf32>
    %90 = arith.addf %88, %89 : vector<8x128xf32>
    %91 = arith.mulf %90, %8 : vector<8x128xf32>
    %92 = math.tanh %91 : vector<8x128xf32>
    %93 = arith.mulf %92, %8 : vector<8x128xf32>
    %94 = arith.addf %93, %11 : vector<8x128xf32>
    %95 = vector.extract_strided_slice %94 {offsets = [0, 0], sizes = [8, 32], strides = [1, 1]} : vector<8x128xf32> to vector<8x32xf32>
    %96 = vector.extract_strided_slice %94 {offsets = [0, 32], sizes = [8, 32], strides = [1, 1]} : vector<8x128xf32> to vector<8x32xf32>
    %97 = vector.extract_strided_slice %94 {offsets = [0, 64], sizes = [8, 32], strides = [1, 1]} : vector<8x128xf32> to vector<8x32xf32>
    %98 = vector.extract_strided_slice %94 {offsets = [0, 96], sizes = [8, 32], strides = [1, 1]} : vector<8x128xf32> to vector<8x32xf32>
    %99 = arith.mulf %96, %68 : vector<8x32xf32>
    %100 = arith.mulf %95, %97 : vector<8x32xf32>
    %101 = arith.addf %99, %100 : vector<8x32xf32>
    %102 = math.tanh %101 : vector<8x32xf32>
    %103 = arith.mulf %98, %102 : vector<8x32xf32>
    %104 = vector.extract_strided_slice %17 {offsets = [24, 0], sizes = [8, 128], strides = [1, 1]} : vector<64x128xf32> to vector<8x128xf32>
    %cst_21 = arith.constant dense<0.000000e+00> : vector<8x128xf32>
    %105 = tpu.matmul %86, %18, %cst_21 {dimension_numbers = #tpu.dot_dimension_numbers<[1], [0], [0], [1], [0, 0, 1, 1], [], []>} : vector<8x32xf32>, vector<32x128xf32>, vector<8x128xf32> -> vector<8x128xf32>
    %106 = arith.addf %104, %105 : vector<8x128xf32>
    %107 = arith.mulf %106, %8 : vector<8x128xf32>
    %108 = math.tanh %107 : vector<8x128xf32>
    %109 = arith.mulf %108, %8 : vector<8x128xf32>
    %110 = arith.addf %109, %11 : vector<8x128xf32>
    %111 = vector.extract_strided_slice %110 {offsets = [0, 0], sizes = [8, 32], strides = [1, 1]} : vector<8x128xf32> to vector<8x32xf32>
    %112 = vector.extract_strided_slice %110 {offsets = [0, 32], sizes = [8, 32], strides = [1, 1]} : vector<8x128xf32> to vector<8x32xf32>
    %113 = vector.extract_strided_slice %110 {offsets = [0, 64], sizes = [8, 32], strides = [1, 1]} : vector<8x128xf32> to vector<8x32xf32>
    %114 = vector.extract_strided_slice %110 {offsets = [0, 96], sizes = [8, 32], strides = [1, 1]} : vector<8x128xf32> to vector<8x32xf32>
    %115 = arith.mulf %112, %84 : vector<8x32xf32>
    %116 = arith.mulf %111, %113 : vector<8x32xf32>
    %117 = arith.addf %115, %116 : vector<8x32xf32>
    %118 = math.tanh %117 : vector<8x32xf32>
    %119 = arith.mulf %114, %118 : vector<8x32xf32>
    %120 = tpu.concatenate %86, %103 in 1 : vector<8x32xf32>, vector<8x32xf32> -> vector<8x64xf32>
    %cst_22 = arith.constant dense<0.000000e+00> : vector<8x128xf32>
    %121 = tpu.matmul %120, %19, %cst_22 {dimension_numbers = #tpu.dot_dimension_numbers<[1], [0], [0], [1], [0, 0, 1, 1], [], []>} : vector<8x64xf32>, vector<64x128xf32>, vector<8x128xf32> -> vector<8x128xf32>
    %122 = vector.broadcast %20 : vector<1x128xf32> to vector<8x128xf32>
    %123 = arith.addf %121, %122 : vector<8x128xf32>
    %124 = arith.mulf %123, %8 : vector<8x128xf32>
    %125 = math.tanh %124 : vector<8x128xf32>
    %126 = arith.mulf %125, %8 : vector<8x128xf32>
    %127 = arith.addf %126, %11 : vector<8x128xf32>
    %128 = vector.extract_strided_slice %127 {offsets = [0, 0], sizes = [8, 32], strides = [1, 1]} : vector<8x128xf32> to vector<8x32xf32>
    %129 = vector.extract_strided_slice %127 {offsets = [0, 32], sizes = [8, 32], strides = [1, 1]} : vector<8x128xf32> to vector<8x32xf32>
    %130 = vector.extract_strided_slice %127 {offsets = [0, 64], sizes = [8, 32], strides = [1, 1]} : vector<8x128xf32> to vector<8x32xf32>
    %131 = vector.extract_strided_slice %127 {offsets = [0, 96], sizes = [8, 32], strides = [1, 1]} : vector<8x128xf32> to vector<8x32xf32>
    %132 = arith.mulf %129, %101 : vector<8x32xf32>
    %133 = arith.mulf %128, %130 : vector<8x32xf32>
    %134 = arith.addf %132, %133 : vector<8x32xf32>
    %135 = math.tanh %134 : vector<8x32xf32>
    %136 = arith.mulf %131, %135 : vector<8x32xf32>
    %137 = vector.extract_strided_slice %17 {offsets = [32, 0], sizes = [8, 128], strides = [1, 1]} : vector<64x128xf32> to vector<8x128xf32>
    %cst_23 = arith.constant dense<0.000000e+00> : vector<8x128xf32>
    %138 = tpu.matmul %119, %18, %cst_23 {dimension_numbers = #tpu.dot_dimension_numbers<[1], [0], [0], [1], [0, 0, 1, 1], [], []>} : vector<8x32xf32>, vector<32x128xf32>, vector<8x128xf32> -> vector<8x128xf32>
    %139 = arith.addf %137, %138 : vector<8x128xf32>
    %140 = arith.mulf %139, %8 : vector<8x128xf32>
    %141 = math.tanh %140 : vector<8x128xf32>
    %142 = arith.mulf %141, %8 : vector<8x128xf32>
    %143 = arith.addf %142, %11 : vector<8x128xf32>
    %144 = vector.extract_strided_slice %143 {offsets = [0, 0], sizes = [8, 32], strides = [1, 1]} : vector<8x128xf32> to vector<8x32xf32>
    %145 = vector.extract_strided_slice %143 {offsets = [0, 32], sizes = [8, 32], strides = [1, 1]} : vector<8x128xf32> to vector<8x32xf32>
    %146 = vector.extract_strided_slice %143 {offsets = [0, 64], sizes = [8, 32], strides = [1, 1]} : vector<8x128xf32> to vector<8x32xf32>
    %147 = vector.extract_strided_slice %143 {offsets = [0, 96], sizes = [8, 32], strides = [1, 1]} : vector<8x128xf32> to vector<8x32xf32>
    %148 = arith.mulf %145, %117 : vector<8x32xf32>
    %149 = arith.mulf %144, %146 : vector<8x32xf32>
    %150 = arith.addf %148, %149 : vector<8x32xf32>
    %151 = math.tanh %150 : vector<8x32xf32>
    %152 = arith.mulf %147, %151 : vector<8x32xf32>
    %153 = tpu.concatenate %119, %136 in 1 : vector<8x32xf32>, vector<8x32xf32> -> vector<8x64xf32>
    %cst_24 = arith.constant dense<0.000000e+00> : vector<8x128xf32>
    %154 = tpu.matmul %153, %19, %cst_24 {dimension_numbers = #tpu.dot_dimension_numbers<[1], [0], [0], [1], [0, 0, 1, 1], [], []>} : vector<8x64xf32>, vector<64x128xf32>, vector<8x128xf32> -> vector<8x128xf32>
    %155 = vector.broadcast %20 : vector<1x128xf32> to vector<8x128xf32>
    %156 = arith.addf %154, %155 : vector<8x128xf32>
    %157 = arith.mulf %156, %8 : vector<8x128xf32>
    %158 = math.tanh %157 : vector<8x128xf32>
    %159 = arith.mulf %158, %8 : vector<8x128xf32>
    %160 = arith.addf %159, %11 : vector<8x128xf32>
    %161 = vector.extract_strided_slice %160 {offsets = [0, 0], sizes = [8, 32], strides = [1, 1]} : vector<8x128xf32> to vector<8x32xf32>
    %162 = vector.extract_strided_slice %160 {offsets = [0, 32], sizes = [8, 32], strides = [1, 1]} : vector<8x128xf32> to vector<8x32xf32>
    %163 = vector.extract_strided_slice %160 {offsets = [0, 64], sizes = [8, 32], strides = [1, 1]} : vector<8x128xf32> to vector<8x32xf32>
    %164 = vector.extract_strided_slice %160 {offsets = [0, 96], sizes = [8, 32], strides = [1, 1]} : vector<8x128xf32> to vector<8x32xf32>
    %165 = arith.mulf %162, %134 : vector<8x32xf32>
    %166 = arith.mulf %161, %163 : vector<8x32xf32>
    %167 = arith.addf %165, %166 : vector<8x32xf32>
    %168 = math.tanh %167 : vector<8x32xf32>
    %169 = arith.mulf %164, %168 : vector<8x32xf32>
    %170 = vector.extract_strided_slice %17 {offsets = [40, 0], sizes = [8, 128], strides = [1, 1]} : vector<64x128xf32> to vector<8x128xf32>
    %cst_25 = arith.constant dense<0.000000e+00> : vector<8x128xf32>
    %171 = tpu.matmul %152, %18, %cst_25 {dimension_numbers = #tpu.dot_dimension_numbers<[1], [0], [0], [1], [0, 0, 1, 1], [], []>} : vector<8x32xf32>, vector<32x128xf32>, vector<8x128xf32> -> vector<8x128xf32>
    %172 = arith.addf %170, %171 : vector<8x128xf32>
    %173 = arith.mulf %172, %8 : vector<8x128xf32>
    %174 = math.tanh %173 : vector<8x128xf32>
    %175 = arith.mulf %174, %8 : vector<8x128xf32>
    %176 = arith.addf %175, %11 : vector<8x128xf32>
    %177 = vector.extract_strided_slice %176 {offsets = [0, 0], sizes = [8, 32], strides = [1, 1]} : vector<8x128xf32> to vector<8x32xf32>
    %178 = vector.extract_strided_slice %176 {offsets = [0, 32], sizes = [8, 32], strides = [1, 1]} : vector<8x128xf32> to vector<8x32xf32>
    %179 = vector.extract_strided_slice %176 {offsets = [0, 64], sizes = [8, 32], strides = [1, 1]} : vector<8x128xf32> to vector<8x32xf32>
    %180 = vector.extract_strided_slice %176 {offsets = [0, 96], sizes = [8, 32], strides = [1, 1]} : vector<8x128xf32> to vector<8x32xf32>
    %181 = arith.mulf %178, %150 : vector<8x32xf32>
    %182 = arith.mulf %177, %179 : vector<8x32xf32>
    %183 = arith.addf %181, %182 : vector<8x32xf32>
    %184 = math.tanh %183 : vector<8x32xf32>
    %185 = arith.mulf %180, %184 : vector<8x32xf32>
    %186 = tpu.concatenate %152, %169 in 1 : vector<8x32xf32>, vector<8x32xf32> -> vector<8x64xf32>
    %cst_26 = arith.constant dense<0.000000e+00> : vector<8x128xf32>
    %187 = tpu.matmul %186, %19, %cst_26 {dimension_numbers = #tpu.dot_dimension_numbers<[1], [0], [0], [1], [0, 0, 1, 1], [], []>} : vector<8x64xf32>, vector<64x128xf32>, vector<8x128xf32> -> vector<8x128xf32>
    %188 = vector.broadcast %20 : vector<1x128xf32> to vector<8x128xf32>
    %189 = arith.addf %187, %188 : vector<8x128xf32>
    %190 = arith.mulf %189, %8 : vector<8x128xf32>
    %191 = math.tanh %190 : vector<8x128xf32>
    %192 = arith.mulf %191, %8 : vector<8x128xf32>
    %193 = arith.addf %192, %11 : vector<8x128xf32>
    %194 = vector.extract_strided_slice %193 {offsets = [0, 0], sizes = [8, 32], strides = [1, 1]} : vector<8x128xf32> to vector<8x32xf32>
    %195 = vector.extract_strided_slice %193 {offsets = [0, 32], sizes = [8, 32], strides = [1, 1]} : vector<8x128xf32> to vector<8x32xf32>
    %196 = vector.extract_strided_slice %193 {offsets = [0, 64], sizes = [8, 32], strides = [1, 1]} : vector<8x128xf32> to vector<8x32xf32>
    %197 = vector.extract_strided_slice %193 {offsets = [0, 96], sizes = [8, 32], strides = [1, 1]} : vector<8x128xf32> to vector<8x32xf32>
    %198 = arith.mulf %195, %167 : vector<8x32xf32>
    %199 = arith.mulf %194, %196 : vector<8x32xf32>
    %200 = arith.addf %198, %199 : vector<8x32xf32>
    %201 = math.tanh %200 : vector<8x32xf32>
    %202 = arith.mulf %197, %201 : vector<8x32xf32>
    %203 = vector.extract_strided_slice %17 {offsets = [48, 0], sizes = [8, 128], strides = [1, 1]} : vector<64x128xf32> to vector<8x128xf32>
    %cst_27 = arith.constant dense<0.000000e+00> : vector<8x128xf32>
    %204 = tpu.matmul %185, %18, %cst_27 {dimension_numbers = #tpu.dot_dimension_numbers<[1], [0], [0], [1], [0, 0, 1, 1], [], []>} : vector<8x32xf32>, vector<32x128xf32>, vector<8x128xf32> -> vector<8x128xf32>
    %205 = arith.addf %203, %204 : vector<8x128xf32>
    %206 = arith.mulf %205, %8 : vector<8x128xf32>
    %207 = math.tanh %206 : vector<8x128xf32>
    %208 = arith.mulf %207, %8 : vector<8x128xf32>
    %209 = arith.addf %208, %11 : vector<8x128xf32>
    %210 = vector.extract_strided_slice %209 {offsets = [0, 0], sizes = [8, 32], strides = [1, 1]} : vector<8x128xf32> to vector<8x32xf32>
    %211 = vector.extract_strided_slice %209 {offsets = [0, 32], sizes = [8, 32], strides = [1, 1]} : vector<8x128xf32> to vector<8x32xf32>
    %212 = vector.extract_strided_slice %209 {offsets = [0, 64], sizes = [8, 32], strides = [1, 1]} : vector<8x128xf32> to vector<8x32xf32>
    %213 = vector.extract_strided_slice %209 {offsets = [0, 96], sizes = [8, 32], strides = [1, 1]} : vector<8x128xf32> to vector<8x32xf32>
    %214 = arith.mulf %211, %183 : vector<8x32xf32>
    %215 = arith.mulf %210, %212 : vector<8x32xf32>
    %216 = arith.addf %214, %215 : vector<8x32xf32>
    %217 = math.tanh %216 : vector<8x32xf32>
    %218 = arith.mulf %213, %217 : vector<8x32xf32>
    %219 = tpu.concatenate %185, %202 in 1 : vector<8x32xf32>, vector<8x32xf32> -> vector<8x64xf32>
    %cst_28 = arith.constant dense<0.000000e+00> : vector<8x128xf32>
    %220 = tpu.matmul %219, %19, %cst_28 {dimension_numbers = #tpu.dot_dimension_numbers<[1], [0], [0], [1], [0, 0, 1, 1], [], []>} : vector<8x64xf32>, vector<64x128xf32>, vector<8x128xf32> -> vector<8x128xf32>
    %221 = vector.broadcast %20 : vector<1x128xf32> to vector<8x128xf32>
    %222 = arith.addf %220, %221 : vector<8x128xf32>
    %223 = arith.mulf %222, %8 : vector<8x128xf32>
    %224 = math.tanh %223 : vector<8x128xf32>
    %225 = arith.mulf %224, %8 : vector<8x128xf32>
    %226 = arith.addf %225, %11 : vector<8x128xf32>
    %227 = vector.extract_strided_slice %226 {offsets = [0, 0], sizes = [8, 32], strides = [1, 1]} : vector<8x128xf32> to vector<8x32xf32>
    %228 = vector.extract_strided_slice %226 {offsets = [0, 32], sizes = [8, 32], strides = [1, 1]} : vector<8x128xf32> to vector<8x32xf32>
    %229 = vector.extract_strided_slice %226 {offsets = [0, 64], sizes = [8, 32], strides = [1, 1]} : vector<8x128xf32> to vector<8x32xf32>
    %230 = vector.extract_strided_slice %226 {offsets = [0, 96], sizes = [8, 32], strides = [1, 1]} : vector<8x128xf32> to vector<8x32xf32>
    %231 = arith.mulf %228, %200 : vector<8x32xf32>
    %232 = arith.mulf %227, %229 : vector<8x32xf32>
    %233 = arith.addf %231, %232 : vector<8x32xf32>
    %234 = math.tanh %233 : vector<8x32xf32>
    %235 = arith.mulf %230, %234 : vector<8x32xf32>
    %236 = vector.extract_strided_slice %17 {offsets = [56, 0], sizes = [8, 128], strides = [1, 1]} : vector<64x128xf32> to vector<8x128xf32>
    %cst_29 = arith.constant dense<0.000000e+00> : vector<8x128xf32>
    %237 = tpu.matmul %218, %18, %cst_29 {dimension_numbers = #tpu.dot_dimension_numbers<[1], [0], [0], [1], [0, 0, 1, 1], [], []>} : vector<8x32xf32>, vector<32x128xf32>, vector<8x128xf32> -> vector<8x128xf32>
    %238 = arith.addf %236, %237 : vector<8x128xf32>
    %239 = arith.mulf %238, %8 : vector<8x128xf32>
    %240 = math.tanh %239 : vector<8x128xf32>
    %241 = arith.mulf %240, %8 : vector<8x128xf32>
    %242 = arith.addf %241, %11 : vector<8x128xf32>
    %243 = vector.extract_strided_slice %242 {offsets = [0, 0], sizes = [8, 32], strides = [1, 1]} : vector<8x128xf32> to vector<8x32xf32>
    %244 = vector.extract_strided_slice %242 {offsets = [0, 32], sizes = [8, 32], strides = [1, 1]} : vector<8x128xf32> to vector<8x32xf32>
    %245 = vector.extract_strided_slice %242 {offsets = [0, 64], sizes = [8, 32], strides = [1, 1]} : vector<8x128xf32> to vector<8x32xf32>
    %246 = vector.extract_strided_slice %242 {offsets = [0, 96], sizes = [8, 32], strides = [1, 1]} : vector<8x128xf32> to vector<8x32xf32>
    %247 = arith.mulf %244, %216 : vector<8x32xf32>
    %248 = arith.mulf %243, %245 : vector<8x32xf32>
    %249 = arith.addf %247, %248 : vector<8x32xf32>
    %250 = math.tanh %249 : vector<8x32xf32>
    %251 = arith.mulf %246, %250 : vector<8x32xf32>
    %252 = tpu.concatenate %218, %235 in 1 : vector<8x32xf32>, vector<8x32xf32> -> vector<8x64xf32>
    %cst_30 = arith.constant dense<0.000000e+00> : vector<8x128xf32>
    %253 = tpu.matmul %252, %19, %cst_30 {dimension_numbers = #tpu.dot_dimension_numbers<[1], [0], [0], [1], [0, 0, 1, 1], [], []>} : vector<8x64xf32>, vector<64x128xf32>, vector<8x128xf32> -> vector<8x128xf32>
    %254 = vector.broadcast %20 : vector<1x128xf32> to vector<8x128xf32>
    %255 = arith.addf %253, %254 : vector<8x128xf32>
    %256 = arith.mulf %255, %8 : vector<8x128xf32>
    %257 = math.tanh %256 : vector<8x128xf32>
    %258 = arith.mulf %257, %8 : vector<8x128xf32>
    %259 = arith.addf %258, %11 : vector<8x128xf32>
    %260 = vector.extract_strided_slice %259 {offsets = [0, 0], sizes = [8, 32], strides = [1, 1]} : vector<8x128xf32> to vector<8x32xf32>
    %261 = vector.extract_strided_slice %259 {offsets = [0, 32], sizes = [8, 32], strides = [1, 1]} : vector<8x128xf32> to vector<8x32xf32>
    %262 = vector.extract_strided_slice %259 {offsets = [0, 64], sizes = [8, 32], strides = [1, 1]} : vector<8x128xf32> to vector<8x32xf32>
    %263 = vector.extract_strided_slice %259 {offsets = [0, 96], sizes = [8, 32], strides = [1, 1]} : vector<8x128xf32> to vector<8x32xf32>
    %264 = arith.mulf %261, %233 : vector<8x32xf32>
    %265 = arith.mulf %260, %262 : vector<8x32xf32>
    %266 = arith.addf %264, %265 : vector<8x32xf32>
    %267 = math.tanh %266 : vector<8x32xf32>
    %268 = arith.mulf %263, %267 : vector<8x32xf32>
    %269 = tpu.concatenate %251, %268 in 1 : vector<8x32xf32>, vector<8x32xf32> -> vector<8x64xf32>
    %cst_31 = arith.constant dense<0.000000e+00> : vector<8x128xf32>
    %270 = tpu.matmul %269, %19, %cst_31 {dimension_numbers = #tpu.dot_dimension_numbers<[1], [0], [0], [1], [0, 0, 1, 1], [], []>} : vector<8x64xf32>, vector<64x128xf32>, vector<8x128xf32> -> vector<8x128xf32>
    %271 = vector.broadcast %20 : vector<1x128xf32> to vector<8x128xf32>
    %272 = arith.addf %270, %271 : vector<8x128xf32>
    %273 = arith.mulf %272, %8 : vector<8x128xf32>
    %274 = math.tanh %273 : vector<8x128xf32>
    %275 = arith.mulf %274, %8 : vector<8x128xf32>
    %276 = arith.addf %275, %11 : vector<8x128xf32>
    %277 = vector.extract_strided_slice %276 {offsets = [0, 0], sizes = [8, 32], strides = [1, 1]} : vector<8x128xf32> to vector<8x32xf32>
    %278 = vector.extract_strided_slice %276 {offsets = [0, 32], sizes = [8, 32], strides = [1, 1]} : vector<8x128xf32> to vector<8x32xf32>
    %279 = vector.extract_strided_slice %276 {offsets = [0, 64], sizes = [8, 32], strides = [1, 1]} : vector<8x128xf32> to vector<8x32xf32>
    %280 = vector.extract_strided_slice %276 {offsets = [0, 96], sizes = [8, 32], strides = [1, 1]} : vector<8x128xf32> to vector<8x32xf32>
    %281 = arith.mulf %278, %266 : vector<8x32xf32>
    %282 = arith.mulf %277, %279 : vector<8x32xf32>
    %283 = arith.addf %281, %282 : vector<8x32xf32>
    %284 = math.tanh %283 : vector<8x32xf32>
    %285 = arith.mulf %280, %284 : vector<8x32xf32>
    %c0_32 = arith.constant 0 : index
    %c0_33 = arith.constant 0 : index
    %286 = vector.load %arg6[%c0_32, %c0_33] : memref<32x8xf32, #tpu.memory_space<vmem>>, vector<32x8xf32>
    %cst_34 = arith.constant dense<0.000000e+00> : vector<8x8xf32>
    %287 = tpu.matmul %285, %286, %cst_34 {dimension_numbers = #tpu.dot_dimension_numbers<[1], [0], [0], [1], [0, 0, 1, 1], [], []>} : vector<8x32xf32>, vector<32x8xf32>, vector<8x8xf32> -> vector<8x8xf32>
    %c0_35 = arith.constant 0 : index
    %c0_36 = arith.constant 0 : index
    %288 = vector.load %arg7[%c0_35, %c0_36] : memref<1x8xf32, #tpu.memory_space<vmem>>, vector<1x8xf32>
    %289 = vector.broadcast %288 : vector<1x8xf32> to vector<8x8xf32>
    %290 = arith.addf %287, %289 : vector<8x8xf32>
    %c0_37 = arith.constant 0 : index
    %c0_38 = arith.constant 0 : index
    %291 = vector.load %arg8[%c0_37, %c0_38] : memref<8x8xf32, #tpu.memory_space<vmem>>, vector<8x8xf32>
    tpu.vector_store %arg8[%c0_37, %c0_38], %290 {strides = array<i32>} : memref<8x8xf32, #tpu.memory_space<vmem>>, vector<8x8xf32>,
    return
  }
}

</mosaic_0001>

<llo_original>
// kernel: lstm_forward.1
$region0: #{lstm_forward.1}
  #allocation0 [shape = 'u32[]', space=smem, size = 0x4, offset = 0x4, fixed_abs, tag = 'smem constant byte address 0x4 - core index']
  #allocation1 [shape = 'u32[144,128]{1,0:T(1,128)}', space=vmem, size = 0x12000, scoped, tag = 'internal scratch']
  %s0 = inlined_call_operand.vmem [shape: f32[64,16], index: 0, kind: input, shape index: {}]
  %s1 = inlined_call_operand.vmem [shape: f32[16,128], index: 1, kind: input, shape index: {}]
  %s2 = inlined_call_operand.vmem [shape: f32[32,128], index: 2, kind: input, shape index: {}]
  %s3 = inlined_call_operand.vmem [shape: f32[1,128], index: 3, kind: input, shape index: {}]
  %s4 = inlined_call_operand.vmem [shape: f32[64,128], index: 4, kind: input, shape index: {}]
  %s5 = inlined_call_operand.vmem [shape: f32[1,128], index: 5, kind: input, shape index: {}]
  %s6 = inlined_call_operand.vmem [shape: f32[32,8], index: 6, kind: input, shape index: {}]
  %s7 = inlined_call_operand.vmem [shape: f32[1,8], index: 7, kind: input, shape index: {}]
  %s8 = inlined_call_operand.vmem [shape: f32[8,8], index: 8, kind: output, shape index: {}]
  %s9 = sld [smem:[#allocation0]]
  $region42: #{lstm_forward.1} parent=0
    _
  %s11 = ssub.s32 1, %s9
  %s12 = scalar_select 0, %s11, %s9
  // Predicated region
  $region2: #{lstm_forward.1} parent=0 // pred_check
    _
  $region3: #{lstm_forward.1} parent=0 // pred_check_branch
    %14 = sbr.rel (0) target = $region5
  $region4: #{lstm_forward.1} parent=0 // pred_region
    _
  $region5: #{lstm_forward.1} parent=0 // pred_fallthru
    _
  // Predicated region
  $region6: #{lstm_forward.1} parent=0 // pred_check
    _
  $region7: #{lstm_forward.1} parent=0 // pred_check_branch
    %16 = sbr.rel (0) target = $region9
  $region8: #{lstm_forward.1} parent=0 // pred_region
    _
  $region9: #{lstm_forward.1} parent=0 // pred_fallthru
    _
  // Predicated region
  $region10: #{lstm_forward.1} parent=0 // pred_check
    _
  $region11: #{lstm_forward.1} parent=0 // pred_check_branch
    %18 = sbr.rel (0) target = $region13
  $region12: #{lstm_forward.1} parent=0 // pred_region
    _
  $region13: #{lstm_forward.1} parent=0 // pred_fallthru
    _
  // Predicated region
  $region14: #{lstm_forward.1} parent=0 // pred_check
    _
  $region15: #{lstm_forward.1} parent=0 // pred_check_branch
    %20 = sbr.rel (0) target = $region17
  $region16: #{lstm_forward.1} parent=0 // pred_region
    _
  $region17: #{lstm_forward.1} parent=0 // pred_fallthru
    _
  // Predicated region
  $region18: #{lstm_forward.1} parent=0 // pred_check
    _
  $region19: #{lstm_forward.1} parent=0 // pred_check_branch
    %22 = sbr.rel (0) target = $region21
  $region20: #{lstm_forward.1} parent=0 // pred_region
    _
  $region21: #{lstm_forward.1} parent=0 // pred_fallthru
    _
  // Predicated region
  $region22: #{lstm_forward.1} parent=0 // pred_check
    _
  $region23: #{lstm_forward.1} parent=0 // pred_check_branch
    %24 = sbr.rel (0) target = $region25
  $region24: #{lstm_forward.1} parent=0 // pred_region
    _
  $region25: #{lstm_forward.1} parent=0 // pred_fallthru
    _
  // Predicated region
  $region26: #{lstm_forward.1} parent=0 // pred_check
    _
  $region27: #{lstm_forward.1} parent=0 // pred_check_branch
    %26 = sbr.rel (0) target = $region29
  $region28: #{lstm_forward.1} parent=0 // pred_region
    _
  $region29: #{lstm_forward.1} parent=0 // pred_fallthru
    _
  // Predicated region
  $region30: #{lstm_forward.1} parent=0 // pred_check
    _
  $region31: #{lstm_forward.1} parent=0 // pred_check_branch
    %28 = sbr.rel (0) target = $region33
  $region32: #{lstm_forward.1} parent=0 // pred_region
    _
  $region33: #{lstm_forward.1} parent=0 // pred_fallthru
    _
  %v29 = vlaneseq
  %v30 = vand.u32 %v29, 127
  %vm31 = vcmp.ge.s32.totalorder %v30, 64
  %vm32 = vcmp.lt.s32.totalorder %v30, 96
  %vm33 = vmand %vm31, %vm32
  %v34 = vsel %vm33, 1.0, 0.5
  %v35 = vsel %vm33, 0.0, 0.5
  %v36 = vld [vmem:[%s0] sm:$0xff]
  %v37 = vld [vmem:[%s0 + $0x8] sm:$0xff]
  %v38 = vld [vmem:[%s0 + $0x10] sm:$0xff]
  %v39 = vld [vmem:[%s0 + $0x18] sm:$0xff]
  %v40 = vld [vmem:[%s0 + $0x20] sm:$0xff]
  %v41 = vld [vmem:[%s0 + $0x28] sm:$0xff]
  %v42 = vld [vmem:[%s0 + $0x30] sm:$0xff]
  %v43 = vld [vmem:[%s0 + $0x38] sm:$0xff]
  %v44 = vld [vmem:[%s1] sm:$0xff]
  %v45 = vld [vmem:[%s1 + $0x8] sm:$0xff]
  %v46 = vld [vmem:[%s3] sm:$0x1]
  %v48 = vlaneseq
  %v49 = vshrl.u32 %v48, 7
  %v50 = vsub.s32 0, %v49
  %v51 = vrot.slane %v46, %v50
  %vm53 = vcmask 130048
  %v55 = vsel %vm53, %v36, 0
  %v58 = vsel %vm53, %v37, 0
  %v61 = vsel %vm53, %v38, 0
  %v64 = vsel %vm53, %v39, 0
  %v67 = vsel %vm53, %v40, 0
  %v70 = vsel %vm53, %v41, 0
  %v73 = vsel %vm53, %v42, 0
  %v76 = vsel %vm53, %v43, 0
  %78 = vmatprep.subr.mxu0 0.0
  %79 = vmatpush1.msra.mxu0 0.0
  %80 = vmatprep.subr.mxu0 0.0
  %81 = vmatpush1.msra.mxu0 0.0
  %82 = vmatprep.subr.mxu0 0.0
  %83 = vmatpush1.msra.mxu0 0.0
  %84 = vmatprep.subr.mxu0 0.0
  %85 = vmatpush1.msra.mxu0 0.0
  %86 = vmatprep.subr.mxu0 0.0
  %87 = vmatpush1.msra.mxu0 0.0
  %88 = vmatprep.subr.mxu0 0.0
  %89 = vmatpush1.msra.mxu0 0.0
  %90 = vmatprep.subr.mxu0 0.0
  %91 = vmatpush1.msra.mxu0 0.0
  %92 = vmatprep.subr.mxu0 0.0
  %93 = vmatpush1.msra.mxu0 0.0
  %94 = vmatprep.subr.mxu0 0.0
  %95 = vmatpush1.msra.mxu0 0.0
  %96 = vmatprep.subr.mxu0 0.0
  %97 = vmatpush1.msra.mxu0 0.0
  %98 = vmatprep.subr.mxu0 0.0
  %99 = vmatpush1.msra.mxu0 0.0
  %100 = vmatprep.subr.mxu0 0.0
  %101 = vmatpush1.msra.mxu0 0.0
  %102 = vmatprep.subr.mxu0 0.0
  %103 = vmatpush1.msra.mxu0 0.0
  %104 = vmatprep.subr.mxu0 0.0
  %105 = vmatpush1.msra.mxu0 0.0
  %106 = vmatprep.subr.mxu0 0.0
  %107 = vmatpush1.msra.mxu0 %v45
  %108 = vmatprep.subr.mxu0 0.0
  %109 = vmatpush1.msra.mxu0 %v44
  %110 = vmatprep.subr.mxu0 0.0
  %111 = vmatpush2.msra.mxu0 0.0
  %112 = vmatprep.subr.mxu0 0.0
  %113 = vmatpush2.msra.mxu0 0.0
  %114 = vmatprep.subr.mxu0 0.0
  %115 = vmatpush2.msra.mxu0 0.0
  %116 = vmatprep.subr.mxu0 0.0
  %117 = vmatpush2.msra.mxu0 0.0
  %118 = vmatprep.subr.mxu0 0.0
  %119 = vmatpush2.msra.mxu0 0.0
  %120 = vmatprep.subr.mxu0 0.0
  %121 = vmatpush2.msra.mxu0 0.0
  %122 = vmatprep.subr.mxu0 0.0
  %123 = vmatpush2.msra.mxu0 0.0
  %124 = vmatprep.subr.mxu0 0.0
  %125 = vmatpush2.msra.mxu0 0.0
  %126 = vmatprep.subr.mxu0 0.0
  %127 = vmatpush2.msra.mxu0 0.0
  %128 = vmatprep.subr.mxu0 0.0
  %129 = vmatpush2.msra.mxu0 0.0
  %130 = vmatprep.subr.mxu0 0.0
  %131 = vmatpush2.msra.mxu0 0.0
  %132 = vmatprep.subr.mxu0 0.0
  %133 = vmatpush2.msra.mxu0 0.0
  %134 = vmatprep.subr.mxu0 0.0
  %135 = vmatpush2.msra.mxu0 0.0
  %136 = vmatprep.subr.mxu0 0.0
  %137 = vmatpush2.msra.mxu0 0.0
  %138 = vmatprep.subr.mxu0 0.0
  %139 = vmatpush2.msra.mxu0 0.0
  %140 = vmatprep.subr.mxu0 0.0
  %141 = vmatpush2.msra.mxu0 0.0
  %142 = vmatprep.mubr.f32.mxu0 0.0
  %143 = vmatmul.mubr.f32.gmra.mxu0 %v55
  %v144 = vpop.f32.mrf.mxu0
  %v145 = vadd.f32 %v51, %v144
  %v146 = vpop.f32.mrf.mxu0
  %147 = vmatprep.mubr.f32.mxu0 0.0
  %148 = vmatmul.mubr.f32.gmra.mxu0 %v58
  %v149 = vpop.f32.mrf.mxu0
  %v150 = vadd.f32 %v51, %v149
  %v151 = vpop.f32.mrf.mxu0
  %152 = vmatprep.mubr.f32.mxu0 0.0
  %153 = vmatmul.mubr.f32.gmra.mxu0 %v61
  %v154 = vpop.f32.mrf.mxu0
  %v155 = vadd.f32 %v51, %v154
  %v156 = vpop.f32.mrf.mxu0
  %157 = vmatprep.mubr.f32.mxu0 0.0
  %158 = vmatmul.mubr.f32.gmra.mxu0 %v64
  %v159 = vpop.f32.mrf.mxu0
  %v160 = vadd.f32 %v51, %v159
  %v161 = vpop.f32.mrf.mxu0
  %162 = vmatprep.mubr.f32.mxu0 0.0
  %163 = vmatmul.mubr.f32.gmra.mxu0 %v67
  %v164 = vpop.f32.mrf.mxu0
  %v165 = vadd.f32 %v51, %v164
  %v166 = vpop.f32.mrf.mxu0
  %167 = vmatprep.mubr.f32.mxu0 0.0
  %168 = vmatmul.mubr.f32.gmra.mxu0 %v70
  %v169 = vpop.f32.mrf.mxu0
  %v170 = vadd.f32 %v51, %v169
  %v171 = vpop.f32.mrf.mxu0
  %172 = vmatprep.mubr.f32.mxu0 0.0
  %173 = vmatmul.mubr.f32.gmra.mxu0 %v73
  %v174 = vpop.f32.mrf.mxu0
  %v175 = vadd.f32 %v51, %v174
  %v176 = vpop.f32.mrf.mxu0
  %177 = vmatprep.mubr.f32.mxu0 0.0
  %178 = vmatmul.mubr.f32.gmra.mxu0 %v76
  %v179 = vpop.f32.mrf.mxu0
  %v180 = vadd.f32 %v51, %v179
  %v181 = vpop.f32.mrf.mxu0
  %182 = vdwg.mxu0
  %v183 = vld [vmem:[%s2] sm:$0xff]
  %v184 = vld [vmem:[%s2 + $0x8] sm:$0xff]
  %v185 = vld [vmem:[%s2 + $0x10] sm:$0xff]
  %v186 = vld [vmem:[%s2 + $0x18] sm:$0xff]
  %v187 = vld [vmem:[%s4] sm:$0xff]
  %v188 = vld [vmem:[%s4 + $0x8] sm:$0xff]
  %v189 = vld [vmem:[%s4 + $0x10] sm:$0xff]
  %v190 = vld [vmem:[%s4 + $0x18] sm:$0xff]
  %v191 = vld [vmem:[%s4 + $0x20] sm:$0xff]
  %v192 = vld [vmem:[%s4 + $0x28] sm:$0xff]
  %v193 = vld [vmem:[%s4 + $0x30] sm:$0xff]
  %v194 = vld [vmem:[%s4 + $0x38] sm:$0xff]
  %v195 = vld [vmem:[%s5] sm:$0x1]
  %vm196 = vcmask 261120
  %v198 = vsel %vm196, 0.0, 0
  %200 = vmatprep.subr.mxu0 0.0
  %201 = vmatpush1.msra.mxu0 0.0
  %202 = vmatprep.subr.mxu0 0.0
  %203 = vmatpush1.msra.mxu0 0.0
  %204 = vmatprep.subr.mxu0 0.0
  %205 = vmatpush1.msra.mxu0 0.0
  %206 = vmatprep.subr.mxu0 0.0
  %207 = vmatpush1.msra.mxu0 0.0
  %208 = vmatprep.subr.mxu0 0.0
  %209 = vmatpush1.msra.mxu0 0.0
  %210 = vmatprep.subr.mxu0 0.0
  %211 = vmatpush1.msra.mxu0 0.0
  %212 = vmatprep.subr.mxu0 0.0
  %213 = vmatpush1.msra.mxu0 0.0
  %214 = vmatprep.subr.mxu0 0.0
  %215 = vmatpush1.msra.mxu0 0.0
  %216 = vmatprep.subr.mxu0 0.0
  %217 = vmatpush1.msra.mxu0 0.0
  %218 = vmatprep.subr.mxu0 0.0
  %219 = vmatpush1.msra.mxu0 0.0
  %220 = vmatprep.subr.mxu0 0.0
  %221 = vmatpush1.msra.mxu0 0.0
  %222 = vmatprep.subr.mxu0 0.0
  %223 = vmatpush1.msra.mxu0 0.0
  %224 = vmatprep.subr.mxu0 0.0
  %225 = vmatpush1.msra.mxu0 %v186
  %226 = vmatprep.subr.mxu0 0.0
  %227 = vmatpush1.msra.mxu0 %v185
  %228 = vmatprep.subr.mxu0 0.0
  %229 = vmatpush1.msra.mxu0 %v184
  %230 = vmatprep.subr.mxu0 0.0
  %231 = vmatpush1.msra.mxu0 %v183
  %232 = vmatprep.subr.mxu0 0.0
  %233 = vmatpush2.msra.mxu0 0.0
  %234 = vmatprep.subr.mxu0 0.0
  %235 = vmatpush2.msra.mxu0 0.0
  %236 = vmatprep.subr.mxu0 0.0
  %237 = vmatpush2.msra.mxu0 0.0
  %238 = vmatprep.subr.mxu0 0.0
  %239 = vmatpush2.msra.mxu0 0.0
  %240 = vmatprep.subr.mxu0 0.0
  %241 = vmatpush2.msra.mxu0 0.0
  %242 = vmatprep.subr.mxu0 0.0
  %243 = vmatpush2.msra.mxu0 0.0
  %244 = vmatprep.subr.mxu0 0.0
  %245 = vmatpush2.msra.mxu0 0.0
  %246 = vmatprep.subr.mxu0 0.0
  %247 = vmatpush2.msra.mxu0 0.0
  %248 = vmatprep.subr.mxu0 0.0
  %249 = vmatpush2.msra.mxu0 0.0
  %250 = vmatprep.subr.mxu0 0.0
  %251 = vmatpush2.msra.mxu0 0.0
  %252 = vmatprep.subr.mxu0 0.0
  %253 = vmatpush2.msra.mxu0 0.0
  %254 = vmatprep.subr.mxu0 0.0
  %255 = vmatpush2.msra.mxu0 0.0
  %256 = vmatprep.subr.mxu0 0.0
  %257 = vmatpush2.msra.mxu0 0.0
  %258 = vmatprep.subr.mxu0 0.0
  %259 = vmatpush2.msra.mxu0 0.0
  %260 = vmatprep.subr.mxu0 0.0
  %261 = vmatpush2.msra.mxu0 0.0
  %262 = vmatprep.subr.mxu0 0.0
  %263 = vmatpush2.msra.mxu0 0.0
  %264 = vmatprep.mubr.f32.mxu0 0.0
  %265 = vmatmul.mubr.f32.gmra.mxu0 %v198
  %v266 = vpop.f32.mrf.mxu0
  %v267 = vadd.f32 0.0, %v266
  %v268 = vpop.f32.mrf.mxu0
  %269 = vdwg.mxu0
  %v270 = vadd.f32 %v145, %v267
  %v271 = vmul.f32 %v270, %v34
  %v272 = vtanh.pop %v271
  %v273 = vmul.f32 %v272, %v34
  %v274 = vadd.f32 %v273, %v35
  %v275 = vmul.f32 %v274, 0.0
  %277 = vrot.lane.b32.xlu0 %v274, 64
  %v278 = vpop.permute.xlu0 %277
  %v280 = vmul.f32 %v274, %v278
  %282 = vrot.lane.b32.xlu0 %v280, 32
  %v283 = vpop.permute.xlu0 %282
  %v285 = vadd.f32 %v275, %v283
  %v286 = vtanh.pop %v285
  %288 = vrot.lane.b32.xlu0 %v286, 64
  %v289 = vpop.permute.xlu0 %288
  %v291 = vmul.f32 %v274, %v289
  %293 = vrot.lane.b32.xlu0 %v291, 32
  %v294 = vpop.permute.xlu0 %293
  %v295 = vsel %vm196, %v294, 0
  %297 = vmatprep.subr.mxu0 0.0
  %298 = vmatpush1.msra.mxu0 0.0
  %299 = vmatprep.subr.mxu0 0.0
  %300 = vmatpush1.msra.mxu0 0.0
  %301 = vmatprep.subr.mxu0 0.0
  %302 = vmatpush1.msra.mxu0 0.0
  %303 = vmatprep.subr.mxu0 0.0
  %304 = vmatpush1.msra.mxu0 0.0
  %305 = vmatprep.subr.mxu0 0.0
  %306 = vmatpush1.msra.mxu0 0.0
  %307 = vmatprep.subr.mxu0 0.0
  %308 = vmatpush1.msra.mxu0 0.0
  %309 = vmatprep.subr.mxu0 0.0
  %310 = vmatpush1.msra.mxu0 0.0
  %311 = vmatprep.subr.mxu0 0.0
  %312 = vmatpush1.msra.mxu0 0.0
  %313 = vmatprep.subr.mxu0 0.0
  %314 = vmatpush1.msra.mxu0 0.0
  %315 = vmatprep.subr.mxu0 0.0
  %316 = vmatpush1.msra.mxu0 0.0
  %317 = vmatprep.subr.mxu0 0.0
  %318 = vmatpush1.msra.mxu0 0.0
  %319 = vmatprep.subr.mxu0 0.0
  %320 = vmatpush1.msra.mxu0 0.0
  %321 = vmatprep.subr.mxu0 0.0
  %322 = vmatpush1.msra.mxu0 %v186
  %323 = vmatprep.subr.mxu0 0.0
  %324 = vmatpush1.msra.mxu0 %v185
  %325 = vmatprep.subr.mxu0 0.0
  %326 = vmatpush1.msra.mxu0 %v184
  %327 = vmatprep.subr.mxu0 0.0
  %328 = vmatpush1.msra.mxu0 %v183
  %329 = vmatprep.subr.mxu0 0.0
  %330 = vmatpush2.msra.mxu0 0.0
  %331 = vmatprep.subr.mxu0 0.0
  %332 = vmatpush2.msra.mxu0 0.0
  %333 = vmatprep.subr.mxu0 0.0
  %334 = vmatpush2.msra.mxu0 0.0
  %335 = vmatprep.subr.mxu0 0.0
  %336 = vmatpush2.msra.mxu0 0.0
  %337 = vmatprep.subr.mxu0 0.0
  %338 = vmatpush2.msra.mxu0 0.0
  %339 = vmatprep.subr.mxu0 0.0
  %340 = vmatpush2.msra.mxu0 0.0
  %341 = vmatprep.subr.mxu0 0.0
  %342 = vmatpush2.msra.mxu0 0.0
  %343 = vmatprep.subr.mxu0 0.0
  %344 = vmatpush2.msra.mxu0 0.0
  %345 = vmatprep.subr.mxu0 0.0
  %346 = vmatpush2.msra.mxu0 0.0
  %347 = vmatprep.subr.mxu0 0.0
  %348 = vmatpush2.msra.mxu0 0.0
  %349 = vmatprep.subr.mxu0 0.0
  %350 = vmatpush2.msra.mxu0 0.0
  %351 = vmatprep.subr.mxu0 0.0
  %352 = vmatpush2.msra.mxu0 0.0
  %353 = vmatprep.subr.mxu0 0.0
  %354 = vmatpush2.msra.mxu0 0.0
  %355 = vmatprep.subr.mxu0 0.0
  %356 = vmatpush2.msra.mxu0 0.0
  %357 = vmatprep.subr.mxu0 0.0
  %358 = vmatpush2.msra.mxu0 0.0
  %359 = vmatprep.subr.mxu0 0.0
  %360 = vmatpush2.msra.mxu0 0.0
  %361 = vmatprep.mubr.f32.mxu0 0.0
  %362 = vmatmul.mubr.f32.gmra.mxu0 %v295
  %v363 = vpop.f32.mrf.mxu0
  %v364 = vadd.f32 0.0, %v363
  %v365 = vpop.f32.mrf.mxu0
  %366 = vdwg.mxu0
  %v367 = vadd.f32 %v150, %v364
  %v368 = vmul.f32 %v367, %v34
  %v369 = vtanh.pop %v368
  %v370 = vmul.f32 %v369, %v34
  %v371 = vadd.f32 %v370, %v35
  %v372 = vmul.f32 %v371, %v285
  %374 = vrot.lane.b32.xlu0 %v371, 64
  %v375 = vpop.permute.xlu0 %374
  %v377 = vmul.f32 %v371, %v375
  %379 = vrot.lane.b32.xlu0 %v377, 32
  %v380 = vpop.permute.xlu0 %379
  %v382 = vadd.f32 %v372, %v380
  %v383 = vtanh.pop %v382
  %385 = vrot.lane.b32.xlu0 %v383, 64
  %v386 = vpop.permute.xlu0 %385
  %v388 = vmul.f32 %v371, %v386
  %v390 = vsel %vm196, %v294, 0.0
  %v392 = vlaneseq
  %v393 = vshrl.u32 %v392, 7
  %v394 = vsub.s32 0, %v393
  %v395 = vrot.slane %v195, %v394
  %vm397 = vcmask 523264
  %v399 = vsel %vm397, %v390, 0
  %401 = vmatprep.subr.mxu0 0.0
  %402 = vmatpush1.msra.mxu0 0.0
  %403 = vmatprep.subr.mxu0 0.0
  %404 = vmatpush1.msra.mxu0 0.0
  %405 = vmatprep.subr.mxu0 0.0
  %406 = vmatpush1.msra.mxu0 0.0
  %407 = vmatprep.subr.mxu0 0.0
  %408 = vmatpush1.msra.mxu0 0.0
  %409 = vmatprep.subr.mxu0 0.0
  %410 = vmatpush1.msra.mxu0 0.0
  %411 = vmatprep.subr.mxu0 0.0
  %412 = vmatpush1.msra.mxu0 0.0
  %413 = vmatprep.subr.mxu0 0.0
  %414 = vmatpush1.msra.mxu0 0.0
  %415 = vmatprep.subr.mxu0 0.0
  %416 = vmatpush1.msra.mxu0 0.0
  %417 = vmatprep.subr.mxu0 0.0
  %418 = vmatpush1.msra.mxu0 %v194
  %419 = vmatprep.subr.mxu0 0.0
  %420 = vmatpush1.msra.mxu0 %v193
  %421 = vmatprep.subr.mxu0 0.0
  %422 = vmatpush1.msra.mxu0 %v192
  %423 = vmatprep.subr.mxu0 0.0
  %424 = vmatpush1.msra.mxu0 %v191
  %425 = vmatprep.subr.mxu0 0.0
  %426 = vmatpush1.msra.mxu0 %v190
  %427 = vmatprep.subr.mxu0 0.0
  %428 = vmatpush1.msra.mxu0 %v189
  %429 = vmatprep.subr.mxu0 0.0
  %430 = vmatpush1.msra.mxu0 %v188
  %431 = vmatprep.subr.mxu0 0.0
  %432 = vmatpush1.msra.mxu0 %v187
  %433 = vmatprep.subr.mxu0 0.0
  %434 = vmatpush2.msra.mxu0 0.0
  %435 = vmatprep.subr.mxu0 0.0
  %436 = vmatpush2.msra.mxu0 0.0
  %437 = vmatprep.subr.mxu0 0.0
  %438 = vmatpush2.msra.mxu0 0.0
  %439 = vmatprep.subr.mxu0 0.0
  %440 = vmatpush2.msra.mxu0 0.0
  %441 = vmatprep.subr.mxu0 0.0
  %442 = vmatpush2.msra.mxu0 0.0
  %443 = vmatprep.subr.mxu0 0.0
  %444 = vmatpush2.msra.mxu0 0.0
  %445 = vmatprep.subr.mxu0 0.0
  %446 = vmatpush2.msra.mxu0 0.0
  %447 = vmatprep.subr.mxu0 0.0
  %448 = vmatpush2.msra.mxu0 0.0
  %449 = vmatprep.subr.mxu0 0.0
  %450 = vmatpush2.msra.mxu0 0.0
  %451 = vmatprep.subr.mxu0 0.0
  %452 = vmatpush2.msra.mxu0 0.0
  %453 = vmatprep.subr.mxu0 0.0
  %454 = vmatpush2.msra.mxu0 0.0
  %455 = vmatprep.subr.mxu0 0.0
  %456 = vmatpush2.msra.mxu0 0.0
  %457 = vmatprep.subr.mxu0 0.0
  %458 = vmatpush2.msra.mxu0 0.0
  %459 = vmatprep.subr.mxu0 0.0
  %460 = vmatpush2.msra.mxu0 0.0
  %461 = vmatprep.subr.mxu0 0.0
  %462 = vmatpush2.msra.mxu0 0.0
  %463 = vmatprep.subr.mxu0 0.0
  %464 = vmatpush2.msra.mxu0 0.0
  %465 = vmatprep.mubr.f32.mxu0 0.0
  %466 = vmatmul.mubr.f32.gmra.mxu0 %v399
  %v467 = vpop.f32.mrf.mxu0
  %v468 = vadd.f32 %v395, %v467
  %v469 = vpop.f32.mrf.mxu0
  %470 = vdwg.mxu0
  %v471 = vmul.f32 %v468, %v34
  %v472 = vtanh.pop %v471
  %v473 = vmul.f32 %v472, %v34
  %v474 = vadd.f32 %v473, %v35
  %v475 = vmul.f32 %v474, 0.0
  %477 = vrot.lane.b32.xlu0 %v474, 64
  %v478 = vpop.permute.xlu0 %477
  %v480 = vmul.f32 %v474, %v478
  %482 = vrot.lane.b32.xlu0 %v480, 32
  %v483 = vpop.permute.xlu0 %482
  %v485 = vadd.f32 %v475, %v483
  %v486 = vtanh.pop %v485
  %488 = vrot.lane.b32.xlu0 %v486, 64
  %v489 = vpop.permute.xlu0 %488
  %v491 = vmul.f32 %v474, %v489
  %493 = vrot.lane.b32.xlu0 %v388, 32
  %v494 = vpop.permute.xlu0 %493
  %v495 = vsel %vm196, %v494, 0
  %497 = vmatprep.subr.mxu0 0.0
  %498 = vmatpush1.msra.mxu0 0.0
  %499 = vmatprep.subr.mxu0 0.0
  %500 = vmatpush1.msra.mxu0 0.0
  %501 = vmatprep.subr.mxu0 0.0
  %502 = vmatpush1.msra.mxu0 0.0
  %503 = vmatprep.subr.mxu0 0.0
  %504 = vmatpush1.msra.mxu0 0.0
  %505 = vmatprep.subr.mxu0 0.0
  %506 = vmatpush1.msra.mxu0 0.0
  %507 = vmatprep.subr.mxu0 0.0
  %508 = vmatpush1.msra.mxu0 0.0
  %509 = vmatprep.subr.mxu0 0.0
  %510 = vmatpush1.msra.mxu0 0.0
  %511 = vmatprep.subr.mxu0 0.0
  %512 = vmatpush1.msra.mxu0 0.0
  %513 = vmatprep.subr.mxu0 0.0
  %514 = vmatpush1.msra.mxu0 0.0
  %515 = vmatprep.subr.mxu0 0.0
  %516 = vmatpush1.msra.mxu0 0.0
  %517 = vmatprep.subr.mxu0 0.0
  %518 = vmatpush1.msra.mxu0 0.0
  %519 = vmatprep.subr.mxu0 0.0
  %520 = vmatpush1.msra.mxu0 0.0
  %521 = vmatprep.subr.mxu0 0.0
  %522 = vmatpush1.msra.mxu0 %v186
  %523 = vmatprep.subr.mxu0 0.0
  %524 = vmatpush1.msra.mxu0 %v185
  %525 = vmatprep.subr.mxu0 0.0
  %526 = vmatpush1.msra.mxu0 %v184
  %527 = vmatprep.subr.mxu0 0.0
  %528 = vmatpush1.msra.mxu0 %v183
  %529 = vmatprep.subr.mxu0 0.0
  %530 = vmatpush2.msra.mxu0 0.0
  %531 = vmatprep.subr.mxu0 0.0
  %532 = vmatpush2.msra.mxu0 0.0
  %533 = vmatprep.subr.mxu0 0.0
  %534 = vmatpush2.msra.mxu0 0.0
  %535 = vmatprep.subr.mxu0 0.0
  %536 = vmatpush2.msra.mxu0 0.0
  %537 = vmatprep.subr.mxu0 0.0
  %538 = vmatpush2.msra.mxu0 0.0
  %539 = vmatprep.subr.mxu0 0.0
  %540 = vmatpush2.msra.mxu0 0.0
  %541 = vmatprep.subr.mxu0 0.0
  %542 = vmatpush2.msra.mxu0 0.0
  %543 = vmatprep.subr.mxu0 0.0
  %544 = vmatpush2.msra.mxu0 0.0
  %545 = vmatprep.subr.mxu0 0.0
  %546 = vmatpush2.msra.mxu0 0.0
  %547 = vmatprep.subr.mxu0 0.0
  %548 = vmatpush2.msra.mxu0 0.0
  %549 = vmatprep.subr.mxu0 0.0
  %550 = vmatpush2.msra.mxu0 0.0
  %551 = vmatprep.subr.mxu0 0.0
  %552 = vmatpush2.msra.mxu0 0.0
  %553 = vmatprep.subr.mxu0 0.0
  %554 = vmatpush2.msra.mxu0 0.0
  %555 = vmatprep.subr.mxu0 0.0
  %556 = vmatpush2.msra.mxu0 0.0
  %557 = vmatprep.subr.mxu0 0.0
  %558 = vmatpush2.msra.mxu0 0.0
  %559 = vmatprep.subr.mxu0 0.0
  %560 = vmatpush2.msra.mxu0 0.0
  %561 = vmatprep.mubr.f32.mxu0 0.0
  %562 = vmatmul.mubr.f32.gmra.mxu0 %v495
  %v563 = vpop.f32.mrf.mxu0
  %v564 = vadd.f32 0.0, %v563
  %v565 = vpop.f32.mrf.mxu0
  %566 = vdwg.mxu0
  %v567 = vadd.f32 %v155, %v564
  %v568 = vmul.f32 %v567, %v34
  %v569 = vtanh.pop %v568
  %v570 = vmul.f32 %v569, %v34
  %v571 = vadd.f32 %v570, %v35
  %v572 = vmul.f32 %v571, %v382
  %574 = vrot.lane.b32.xlu0 %v571, 64
  %v575 = vpop.permute.xlu0 %574
  %v577 = vmul.f32 %v571, %v575
  %579 = vrot.lane.b32.xlu0 %v577, 32
  %v580 = vpop.permute.xlu0 %579
  %v582 = vadd.f32 %v572, %v580
  %v583 = vtanh.pop %v582
  %585 = vrot.lane.b32.xlu0 %v583, 64
  %v586 = vpop.permute.xlu0 %585
  %v588 = vmul.f32 %v571, %v586
  %591 = vrot.lane.b32.xlu0 %v491, 64
  %v592 = vpop.permute.xlu0 %591
  %v594 = vsel %vm196, %v494, %v592
  %v596 = vsel %vm397, %v594, 0
  %598 = vmatprep.subr.mxu0 0.0
  %599 = vmatpush1.msra.mxu0 0.0
  %600 = vmatprep.subr.mxu0 0.0
  %601 = vmatpush1.msra.mxu0 0.0
  %602 = vmatprep.subr.mxu0 0.0
  %603 = vmatpush1.msra.mxu0 0.0
  %604 = vmatprep.subr.mxu0 0.0
  %605 = vmatpush1.msra.mxu0 0.0
  %606 = vmatprep.subr.mxu0 0.0
  %607 = vmatpush1.msra.mxu0 0.0
  %608 = vmatprep.subr.mxu0 0.0
  %609 = vmatpush1.msra.mxu0 0.0
  %610 = vmatprep.subr.mxu0 0.0
  %611 = vmatpush1.msra.mxu0 0.0
  %612 = vmatprep.subr.mxu0 0.0
  %613 = vmatpush1.msra.mxu0 0.0
  %614 = vmatprep.subr.mxu0 0.0
  %615 = vmatpush1.msra.mxu0 %v194
  %616 = vmatprep.subr.mxu0 0.0
  %617 = vmatpush1.msra.mxu0 %v193
  %618 = vmatprep.subr.mxu0 0.0
  %619 = vmatpush1.msra.mxu0 %v192
  %620 = vmatprep.subr.mxu0 0.0
  %621 = vmatpush1.msra.mxu0 %v191
  %622 = vmatprep.subr.mxu0 0.0
  %623 = vmatpush1.msra.mxu0 %v190
  %624 = vmatprep.subr.mxu0 0.0
  %625 = vmatpush1.msra.mxu0 %v189
  %626 = vmatprep.subr.mxu0 0.0
  %627 = vmatpush1.msra.mxu0 %v188
  %628 = vmatprep.subr.mxu0 0.0
  %629 = vmatpush1.msra.mxu0 %v187
  %630 = vmatprep.subr.mxu0 0.0
  %631 = vmatpush2.msra.mxu0 0.0
  %632 = vmatprep.subr.mxu0 0.0
  %633 = vmatpush2.msra.mxu0 0.0
  %634 = vmatprep.subr.mxu0 0.0
  %635 = vmatpush2.msra.mxu0 0.0
  %636 = vmatprep.subr.mxu0 0.0
  %637 = vmatpush2.msra.mxu0 0.0
  %638 = vmatprep.subr.mxu0 0.0
  %639 = vmatpush2.msra.mxu0 0.0
  %640 = vmatprep.subr.mxu0 0.0
  %641 = vmatpush2.msra.mxu0 0.0
  %642 = vmatprep.subr.mxu0 0.0
  %643 = vmatpush2.msra.mxu0 0.0
  %644 = vmatprep.subr.mxu0 0.0
  %645 = vmatpush2.msra.mxu0 0.0
  %646 = vmatprep.subr.mxu0 0.0
  %647 = vmatpush2.msra.mxu0 0.0
  %648 = vmatprep.subr.mxu0 0.0
  %649 = vmatpush2.msra.mxu0 0.0
  %650 = vmatprep.subr.mxu0 0.0
  %651 = vmatpush2.msra.mxu0 0.0
  %652 = vmatprep.subr.mxu0 0.0
  %653 = vmatpush2.msra.mxu0 0.0
  %654 = vmatprep.subr.mxu0 0.0
  %655 = vmatpush2.msra.mxu0 0.0
  %656 = vmatprep.subr.mxu0 0.0
  %657 = vmatpush2.msra.mxu0 0.0
  %658 = vmatprep.subr.mxu0 0.0
  %659 = vmatpush2.msra.mxu0 0.0
  %660 = vmatprep.subr.mxu0 0.0
  %661 = vmatpush2.msra.mxu0 0.0
  %662 = vmatprep.mubr.f32.mxu0 0.0
  %663 = vmatmul.mubr.f32.gmra.mxu0 %v596
  %v664 = vpop.f32.mrf.mxu0
  %v665 = vadd.f32 %v395, %v664
  %v666 = vpop.f32.mrf.mxu0
  %667 = vdwg.mxu0
  %v668 = vmul.f32 %v665, %v34
  %v669 = vtanh.pop %v668
  %v670 = vmul.f32 %v669, %v34
  %v671 = vadd.f32 %v670, %v35
  %v672 = vmul.f32 %v671, %v485
  %674 = vrot.lane.b32.xlu0 %v671, 64
  %v675 = vpop.permute.xlu0 %674
  %v677 = vmul.f32 %v671, %v675
  %679 = vrot.lane.b32.xlu0 %v677, 32
  %v680 = vpop.permute.xlu0 %679
  %v682 = vadd.f32 %v672, %v680
  %v683 = vtanh.pop %v682
  %685 = vrot.lane.b32.xlu0 %v683, 64
  %v686 = vpop.permute.xlu0 %685
  %v688 = vmul.f32 %v671, %v686
  %690 = vrot.lane.b32.xlu0 %v588, 32
  %v691 = vpop.permute.xlu0 %690
  %v692 = vsel %vm196, %v691, 0
  %694 = vmatprep.subr.mxu0 0.0
  %695 = vmatpush1.msra.mxu0 0.0
  %696 = vmatprep.subr.mxu0 0.0
  %697 = vmatpush1.msra.mxu0 0.0
  %698 = vmatprep.subr.mxu0 0.0
  %699 = vmatpush1.msra.mxu0 0.0
  %700 = vmatprep.subr.mxu0 0.0
  %701 = vmatpush1.msra.mxu0 0.0
  %702 = vmatprep.subr.mxu0 0.0
  %703 = vmatpush1.msra.mxu0 0.0
  %704 = vmatprep.subr.mxu0 0.0
  %705 = vmatpush1.msra.mxu0 0.0
  %706 = vmatprep.subr.mxu0 0.0
  %707 = vmatpush1.msra.mxu0 0.0
  %708 = vmatprep.subr.mxu0 0.0
  %709 = vmatpush1.msra.mxu0 0.0
  %710 = vmatprep.subr.mxu0 0.0
  %711 = vmatpush1.msra.mxu0 0.0
  %712 = vmatprep.subr.mxu0 0.0
  %713 = vmatpush1.msra.mxu0 0.0
  %714 = vmatprep.subr.mxu0 0.0
  %715 = vmatpush1.msra.mxu0 0.0
  %716 = vmatprep.subr.mxu0 0.0
  %717 = vmatpush1.msra.mxu0 0.0
  %718 = vmatprep.subr.mxu0 0.0
  %719 = vmatpush1.msra.mxu0 %v186
  %720 = vmatprep.subr.mxu0 0.0
  %721 = vmatpush1.msra.mxu0 %v185
  %722 = vmatprep.subr.mxu0 0.0
  %723 = vmatpush1.msra.mxu0 %v184
  %724 = vmatprep.subr.mxu0 0.0
  %725 = vmatpush1.msra.mxu0 %v183
  %726 = vmatprep.subr.mxu0 0.0
  %727 = vmatpush2.msra.mxu0 0.0
  %728 = vmatprep.subr.mxu0 0.0
  %729 = vmatpush2.msra.mxu0 0.0
  %730 = vmatprep.subr.mxu0 0.0
  %731 = vmatpush2.msra.mxu0 0.0
  %732 = vmatprep.subr.mxu0 0.0
  %733 = vmatpush2.msra.mxu0 0.0
  %734 = vmatprep.subr.mxu0 0.0
  %735 = vmatpush2.msra.mxu0 0.0
  %736 = vmatprep.subr.mxu0 0.0
  %737 = vmatpush2.msra.mxu0 0.0
  %738 = vmatprep.subr.mxu0 0.0
  %739 = vmatpush2.msra.mxu0 0.0
  %740 = vmatprep.subr.mxu0 0.0
  %741 = vmatpush2.msra.mxu0 0.0
  %742 = vmatprep.subr.mxu0 0.0
  %743 = vmatpush2.msra.mxu0 0.0
  %744 = vmatprep.subr.mxu0 0.0
  %745 = vmatpush2.msra.mxu0 0.0
  %746 = vmatprep.subr.mxu0 0.0
  %747 = vmatpush2.msra.mxu0 0.0
  %748 = vmatprep.subr.mxu0 0.0
  %749 = vmatpush2.msra.mxu0 0.0
  %750 = vmatprep.subr.mxu0 0.0
  %751 = vmatpush2.msra.mxu0 0.0
  %752 = vmatprep.subr.mxu0 0.0
  %753 = vmatpush2.msra.mxu0 0.0
  %754 = vmatprep.subr.mxu0 0.0
  %755 = vmatpush2.msra.mxu0 0.0
  %756 = vmatprep.subr.mxu0 0.0
  %757 = vmatpush2.msra.mxu0 0.0
  %758 = vmatprep.mubr.f32.mxu0 0.0
  %759 = vmatmul.mubr.f32.gmra.mxu0 %v692
  %v760 = vpop.f32.mrf.mxu0
  %v761 = vadd.f32 0.0, %v760
  %v762 = vpop.f32.mrf.mxu0
  %763 = vdwg.mxu0
  %v764 = vadd.f32 %v160, %v761
  %v765 = vmul.f32 %v764, %v34
  %v766 = vtanh.pop %v765
  %v767 = vmul.f32 %v766, %v34
  %v768 = vadd.f32 %v767, %v35
  %v769 = vmul.f32 %v768, %v582
  %771 = vrot.lane.b32.xlu0 %v768, 64
  %v772 = vpop.permute.xlu0 %771
  %v774 = vmul.f32 %v768, %v772
  %776 = vrot.lane.b32.xlu0 %v774, 32
  %v777 = vpop.permute.xlu0 %776
  %v779 = vadd.f32 %v769, %v777
  %v780 = vtanh.pop %v779
  %782 = vrot.lane.b32.xlu0 %v780, 64
  %v783 = vpop.permute.xlu0 %782
  %v785 = vmul.f32 %v768, %v783
  %788 = vrot.lane.b32.xlu0 %v688, 64
  %v789 = vpop.permute.xlu0 %788
  %v791 = vsel %vm196, %v691, %v789
  %v793 = vsel %vm397, %v791, 0
  %795 = vmatprep.subr.mxu0 0.0
  %796 = vmatpush1.msra.mxu0 0.0
  %797 = vmatprep.subr.mxu0 0.0
  %798 = vmatpush1.msra.mxu0 0.0
  %799 = vmatprep.subr.mxu0 0.0
  %800 = vmatpush1.msra.mxu0 0.0
  %801 = vmatprep.subr.mxu0 0.0
  %802 = vmatpush1.msra.mxu0 0.0
  %803 = vmatprep.subr.mxu0 0.0
  %804 = vmatpush1.msra.mxu0 0.0
  %805 = vmatprep.subr.mxu0 0.0
  %806 = vmatpush1.msra.mxu0 0.0
  %807 = vmatprep.subr.mxu0 0.0
  %808 = vmatpush1.msra.mxu0 0.0
  %809 = vmatprep.subr.mxu0 0.0
  %810 = vmatpush1.msra.mxu0 0.0
  %811 = vmatprep.subr.mxu0 0.0
  %812 = vmatpush1.msra.mxu0 %v194
  %813 = vmatprep.subr.mxu0 0.0
  %814 = vmatpush1.msra.mxu0 %v193
  %815 = vmatprep.subr.mxu0 0.0
  %816 = vmatpush1.msra.mxu0 %v192
  %817 = vmatprep.subr.mxu0 0.0
  %818 = vmatpush1.msra.mxu0 %v191
  %819 = vmatprep.subr.mxu0 0.0
  %820 = vmatpush1.msra.mxu0 %v190
  %821 = vmatprep.subr.mxu0 0.0
  %822 = vmatpush1.msra.mxu0 %v189
  %823 = vmatprep.subr.mxu0 0.0
  %824 = vmatpush1.msra.mxu0 %v188
  %825 = vmatprep.subr.mxu0 0.0
  %826 = vmatpush1.msra.mxu0 %v187
  %827 = vmatprep.subr.mxu0 0.0
  %828 = vmatpush2.msra.mxu0 0.0
  %829 = vmatprep.subr.mxu0 0.0
  %830 = vmatpush2.msra.mxu0 0.0
  %831 = vmatprep.subr.mxu0 0.0
  %832 = vmatpush2.msra.mxu0 0.0
  %833 = vmatprep.subr.mxu0 0.0
  %834 = vmatpush2.msra.mxu0 0.0
  %835 = vmatprep.subr.mxu0 0.0
  %836 = vmatpush2.msra.mxu0 0.0
  %837 = vmatprep.subr.mxu0 0.0
  %838 = vmatpush2.msra.mxu0 0.0
  %839 = vmatprep.subr.mxu0 0.0
  %840 = vmatpush2.msra.mxu0 0.0
  %841 = vmatprep.subr.mxu0 0.0
  %842 = vmatpush2.msra.mxu0 0.0
  %843 = vmatprep.subr.mxu0 0.0
  %844 = vmatpush2.msra.mxu0 0.0
  %845 = vmatprep.subr.mxu0 0.0
  %846 = vmatpush2.msra.mxu0 0.0
  %847 = vmatprep.subr.mxu0 0.0
  %848 = vmatpush2.msra.mxu0 0.0
  %849 = vmatprep.subr.mxu0 0.0
  %850 = vmatpush2.msra.mxu0 0.0
  %851 = vmatprep.subr.mxu0 0.0
  %852 = vmatpush2.msra.mxu0 0.0
  %853 = vmatprep.subr.mxu0 0.0
  %854 = vmatpush2.msra.mxu0 0.0
  %855 = vmatprep.subr.mxu0 0.0
  %856 = vmatpush2.msra.mxu0 0.0
  %857 = vmatprep.subr.mxu0 0.0
  %858 = vmatpush2.msra.mxu0 0.0
  %859 = vmatprep.mubr.f32.mxu0 0.0
  %860 = vmatmul.mubr.f32.gmra.mxu0 %v793
  %v861 = vpop.f32.mrf.mxu0
  %v862 = vadd.f32 %v395, %v861
  %v863 = vpop.f32.mrf.mxu0
  %864 = vdwg.mxu0
  %v865 = vmul.f32 %v862, %v34
  %v866 = vtanh.pop %v865
  %v867 = vmul.f32 %v866, %v34
  %v868 = vadd.f32 %v867, %v35
  %v869 = vmul.f32 %v868, %v682
  %871 = vrot.lane.b32.xlu0 %v868, 64
  %v872 = vpop.permute.xlu0 %871
  %v874 = vmul.f32 %v868, %v872
  %876 = vrot.lane.b32.xlu0 %v874, 32
  %v877 = vpop.permute.xlu0 %876
  %v879 = vadd.f32 %v869, %v877
  %v880 = vtanh.pop %v879
  %882 = vrot.lane.b32.xlu0 %v880, 64
  %v883 = vpop.permute.xlu0 %882
  %v885 = vmul.f32 %v868, %v883
  %887 = vrot.lane.b32.xlu0 %v785, 32
  %v888 = vpop.permute.xlu0 %887
  %v889 = vsel %vm196, %v888, 0
  %891 = vmatprep.subr.mxu0 0.0
  %892 = vmatpush1.msra.mxu0 0.0
  %893 = vmatprep.subr.mxu0 0.0
  %894 = vmatpush1.msra.mxu0 0.0
  %895 = vmatprep.subr.mxu0 0.0
  %896 = vmatpush1.msra.mxu0 0.0
  %897 = vmatprep.subr.mxu0 0.0
  %898 = vmatpush1.msra.mxu0 0.0
  %899 = vmatprep.subr.mxu0 0.0
  %900 = vmatpush1.msra.mxu0 0.0
  %901 = vmatprep.subr.mxu0 0.0
  %902 = vmatpush1.msra.mxu0 0.0
  %903 = vmatprep.subr.mxu0 0.0
  %904 = vmatpush1.msra.mxu0 0.0
  %905 = vmatprep.subr.mxu0 0.0
  %906 = vmatpush1.msra.mxu0 0.0
  %907 = vmatprep.subr.mxu0 0.0
  %908 = vmatpush1.msra.mxu0 0.0
  %909 = vmatprep.subr.mxu0 0.0
  %910 = vmatpush1.msra.mxu0 0.0
  %911 = vmatprep.subr.mxu0 0.0
  %912 = vmatpush1.msra.mxu0 0.0
  %913 = vmatprep.subr.mxu0 0.0
  %914 = vmatpush1.msra.mxu0 0.0
  %915 = vmatprep.subr.mxu0 0.0
  %916 = vmatpush1.msra.mxu0 %v186
  %917 = vmatprep.subr.mxu0 0.0
  %918 = vmatpush1.msra.mxu0 %v185
  %919 = vmatprep.subr.mxu0 0.0
  %920 = vmatpush1.msra.mxu0 %v184
  %921 = vmatprep.subr.mxu0 0.0
  %922 = vmatpush1.msra.mxu0 %v183
  %923 = vmatprep.subr.mxu0 0.0
  %924 = vmatpush2.msra.mxu0 0.0
  %925 = vmatprep.subr.mxu0 0.0
  %926 = vmatpush2.msra.mxu0 0.0
  %927 = vmatprep.subr.mxu0 0.0
  %928 = vmatpush2.msra.mxu0 0.0
  %929 = vmatprep.subr.mxu0 0.0
  %930 = vmatpush2.msra.mxu0 0.0
  %931 = vmatprep.subr.mxu0 0.0
  %932 = vmatpush2.msra.mxu0 0.0
  %933 = vmatprep.subr.mxu0 0.0
  %934 = vmatpush2.msra.mxu0 0.0
  %935 = vmatprep.subr.mxu0 0.0
  %936 = vmatpush2.msra.mxu0 0.0
  %937 = vmatprep.subr.mxu0 0.0
  %938 = vmatpush2.msra.mxu0 0.0
  %939 = vmatprep.subr.mxu0 0.0
  %940 = vmatpush2.msra.mxu0 0.0
  %941 = vmatprep.subr.mxu0 0.0
  %942 = vmatpush2.msra.mxu0 0.0
  %943 = vmatprep.subr.mxu0 0.0
  %944 = vmatpush2.msra.mxu0 0.0
  %945 = vmatprep.subr.mxu0 0.0
  %946 = vmatpush2.msra.mxu0 0.0
  %947 = vmatprep.subr.mxu0 0.0
  %948 = vmatpush2.msra.mxu0 0.0
  %949 = vmatprep.subr.mxu0 0.0
  %950 = vmatpush2.msra.mxu0 0.0
  %951 = vmatprep.subr.mxu0 0.0
  %952 = vmatpush2.msra.mxu0 0.0
  %953 = vmatprep.subr.mxu0 0.0
  %954 = vmatpush2.msra.mxu0 0.0
  %955 = vmatprep.mubr.f32.mxu0 0.0
  %956 = vmatmul.mubr.f32.gmra.mxu0 %v889
  %v957 = vpop.f32.mrf.mxu0
  %v958 = vadd.f32 0.0, %v957
  %v959 = vpop.f32.mrf.mxu0
  %960 = vdwg.mxu0
  %v961 = vadd.f32 %v165, %v958
  %v962 = vmul.f32 %v961, %v34
  %v963 = vtanh.pop %v962
  %v964 = vmul.f32 %v963, %v34
  %v965 = vadd.f32 %v964, %v35
  %v966 = vmul.f32 %v965, %v779
  %968 = vrot.lane.b32.xlu0 %v965, 64
  %v969 = vpop.permute.xlu0 %968
  %v971 = vmul.f32 %v965, %v969
  %973 = vrot.lane.b32.xlu0 %v971, 32
  %v974 = vpop.permute.xlu0 %973
  %v976 = vadd.f32 %v966, %v974
  %v977 = vtanh.pop %v976
  %979 = vrot.lane.b32.xlu0 %v977, 64
  %v980 = vpop.permute.xlu0 %979
  %v982 = vmul.f32 %v965, %v980
  %985 = vrot.lane.b32.xlu0 %v885, 64
  %v986 = vpop.permute.xlu0 %985
  %v988 = vsel %vm196, %v888, %v986
  %v990 = vsel %vm397, %v988, 0
  %992 = vmatprep.subr.mxu0 0.0
  %993 = vmatpush1.msra.mxu0 0.0
  %994 = vmatprep.subr.mxu0 0.0
  %995 = vmatpush1.msra.mxu0 0.0
  %996 = vmatprep.subr.mxu0 0.0
  %997 = vmatpush1.msra.mxu0 0.0
  %998 = vmatprep.subr.mxu0 0.0
  %999 = vmatpush1.msra.mxu0 0.0
  %1000 = vmatprep.subr.mxu0 0.0
  %1001 = vmatpush1.msra.mxu0 0.0
  %1002 = vmatprep.subr.mxu0 0.0
  %1003 = vmatpush1.msra.mxu0 0.0
  %1004 = vmatprep.subr.mxu0 0.0
  %1005 = vmatpush1.msra.mxu0 0.0
  %1006 = vmatprep.subr.mxu0 0.0
  %1007 = vmatpush1.msra.mxu0 0.0
  %1008 = vmatprep.subr.mxu0 0.0
  %1009 = vmatpush1.msra.mxu0 %v194
  %1010 = vmatprep.subr.mxu0 0.0
  %1011 = vmatpush1.msra.mxu0 %v193
  %1012 = vmatprep.subr.mxu0 0.0
  %1013 = vmatpush1.msra.mxu0 %v192
  %1014 = vmatprep.subr.mxu0 0.0
  %1015 = vmatpush1.msra.mxu0 %v191
  %1016 = vmatprep.subr.mxu0 0.0
  %1017 = vmatpush1.msra.mxu0 %v190
  %1018 = vmatprep.subr.mxu0 0.0
  %1019 = vmatpush1.msra.mxu0 %v189
  %1020 = vmatprep.subr.mxu0 0.0
  %1021 = vmatpush1.msra.mxu0 %v188
  %1022 = vmatprep.subr.mxu0 0.0
  %1023 = vmatpush1.msra.mxu0 %v187
  %1024 = vmatprep.subr.mxu0 0.0
  %1025 = vmatpush2.msra.mxu0 0.0
  %1026 = vmatprep.subr.mxu0 0.0
  %1027 = vmatpush2.msra.mxu0 0.0
  %1028 = vmatprep.subr.mxu0 0.0
  %1029 = vmatpush2.msra.mxu0 0.0
  %1030 = vmatprep.subr.mxu0 0.0
  %1031 = vmatpush2.msra.mxu0 0.0
  %1032 = vmatprep.subr.mxu0 0.0
  %1033 = vmatpush2.msra.mxu0 0.0
  %1034 = vmatprep.subr.mxu0 0.0
  %1035 = vmatpush2.msra.mxu0 0.0
  %1036 = vmatprep.subr.mxu0 0.0
  %1037 = vmatpush2.msra.mxu0 0.0
  %1038 = vmatprep.subr.mxu0 0.0
  %1039 = vmatpush2.msra.mxu0 0.0
  %1040 = vmatprep.subr.mxu0 0.0
  %1041 = vmatpush2.msra.mxu0 0.0
  %1042 = vmatprep.subr.mxu0 0.0
  %1043 = vmatpush2.msra.mxu0 0.0
  %1044 = vmatprep.subr.mxu0 0.0
  %1045 = vmatpush2.msra.mxu0 0.0
  %1046 = vmatprep.subr.mxu0 0.0
  %1047 = vmatpush2.msra.mxu0 0.0
  %1048 = vmatprep.subr.mxu0 0.0
  %1049 = vmatpush2.msra.mxu0 0.0
  %1050 = vmatprep.subr.mxu0 0.0
  %1051 = vmatpush2.msra.mxu0 0.0
  %1052 = vmatprep.subr.mxu0 0.0
  %1053 = vmatpush2.msra.mxu0 0.0
  %1054 = vmatprep.subr.mxu0 0.0
  %1055 = vmatpush2.msra.mxu0 0.0
  %1056 = vmatprep.mubr.f32.mxu0 0.0
  %1057 = vmatmul.mubr.f32.gmra.mxu0 %v990
  %v1058 = vpop.f32.mrf.mxu0
  %v1059 = vadd.f32 %v395, %v1058
  %v1060 = vpop.f32.mrf.mxu0
  %1061 = vdwg.mxu0
  %v1062 = vmul.f32 %v1059, %v34
  %v1063 = vtanh.pop %v1062
  %v1064 = vmul.f32 %v1063, %v34
  %v1065 = vadd.f32 %v1064, %v35
  %v1066 = vmul.f32 %v1065, %v879
  %1068 = vrot.lane.b32.xlu0 %v1065, 64
  %v1069 = vpop.permute.xlu0 %1068
  %v1071 = vmul.f32 %v1065, %v1069
  %1073 = vrot.lane.b32.xlu0 %v1071, 32
  %v1074 = vpop.permute.xlu0 %1073
  %v1076 = vadd.f32 %v1066, %v1074
  %v1077 = vtanh.pop %v1076
  %1079 = vrot.lane.b32.xlu0 %v1077, 64
  %v1080 = vpop.permute.xlu0 %1079
  %v1082 = vmul.f32 %v1065, %v1080
  %1084 = vrot.lane.b32.xlu0 %v982, 32
  %v1085 = vpop.permute.xlu0 %1084
  %v1086 = vsel %vm196, %v1085, 0
  %1088 = vmatprep.subr.mxu0 0.0
  %1089 = vmatpush1.msra.mxu0 0.0
  %1090 = vmatprep.subr.mxu0 0.0
  %1091 = vmatpush1.msra.mxu0 0.0
  %1092 = vmatprep.subr.mxu0 0.0
  %1093 = vmatpush1.msra.mxu0 0.0
  %1094 = vmatprep.subr.mxu0 0.0
  %1095 = vmatpush1.msra.mxu0 0.0
  %1096 = vmatprep.subr.mxu0 0.0
  %1097 = vmatpush1.msra.mxu0 0.0
  %1098 = vmatprep.subr.mxu0 0.0
  %1099 = vmatpush1.msra.mxu0 0.0
  %1100 = vmatprep.subr.mxu0 0.0
  %1101 = vmatpush1.msra.mxu0 0.0
  %1102 = vmatprep.subr.mxu0 0.0
  %1103 = vmatpush1.msra.mxu0 0.0
  %1104 = vmatprep.subr.mxu0 0.0
  %1105 = vmatpush1.msra.mxu0 0.0
  %1106 = vmatprep.subr.mxu0 0.0
  %1107 = vmatpush1.msra.mxu0 0.0
  %1108 = vmatprep.subr.mxu0 0.0
  %1109 = vmatpush1.msra.mxu0 0.0
  %1110 = vmatprep.subr.mxu0 0.0
  %1111 = vmatpush1.msra.mxu0 0.0
  %1112 = vmatprep.subr.mxu0 0.0
  %1113 = vmatpush1.msra.mxu0 %v186
  %1114 = vmatprep.subr.mxu0 0.0
  %1115 = vmatpush1.msra.mxu0 %v185
  %1116 = vmatprep.subr.mxu0 0.0
  %1117 = vmatpush1.msra.mxu0 %v184
  %1118 = vmatprep.subr.mxu0 0.0
  %1119 = vmatpush1.msra.mxu0 %v183
  %1120 = vmatprep.subr.mxu0 0.0
  %1121 = vmatpush2.msra.mxu0 0.0
  %1122 = vmatprep.subr.mxu0 0.0
  %1123 = vmatpush2.msra.mxu0 0.0
  %1124 = vmatprep.subr.mxu0 0.0
  %1125 = vmatpush2.msra.mxu0 0.0
  %1126 = vmatprep.subr.mxu0 0.0
  %1127 = vmatpush2.msra.mxu0 0.0
  %1128 = vmatprep.subr.mxu0 0.0
  %1129 = vmatpush2.msra.mxu0 0.0
  %1130 = vmatprep.subr.mxu0 0.0
  %1131 = vmatpush2.msra.mxu0 0.0
  %1132 = vmatprep.subr.mxu0 0.0
  %1133 = vmatpush2.msra.mxu0 0.0
  %1134 = vmatprep.subr.mxu0 0.0
  %1135 = vmatpush2.msra.mxu0 0.0
  %1136 = vmatprep.subr.mxu0 0.0
  %1137 = vmatpush2.msra.mxu0 0.0
  %1138 = vmatprep.subr.mxu0 0.0
  %1139 = vmatpush2.msra.mxu0 0.0
  %1140 = vmatprep.subr.mxu0 0.0
  %1141 = vmatpush2.msra.mxu0 0.0
  %1142 = vmatprep.subr.mxu0 0.0
  %1143 = vmatpush2.msra.mxu0 0.0
  %1144 = vmatprep.subr.mxu0 0.0
  %1145 = vmatpush2.msra.mxu0 0.0
  %1146 = vmatprep.subr.mxu0 0.0
  %1147 = vmatpush2.msra.mxu0 0.0
  %1148 = vmatprep.subr.mxu0 0.0
  %1149 = vmatpush2.msra.mxu0 0.0
  %1150 = vmatprep.subr.mxu0 0.0
  %1151 = vmatpush2.msra.mxu0 0.0
  %1152 = vmatprep.mubr.f32.mxu0 0.0
  %1153 = vmatmul.mubr.f32.gmra.mxu0 %v1086
  %v1154 = vpop.f32.mrf.mxu0
  %v1155 = vadd.f32 0.0, %v1154
  %v1156 = vpop.f32.mrf.mxu0
  %1157 = vdwg.mxu0
  %v1158 = vadd.f32 %v170, %v1155
  %v1159 = vmul.f32 %v1158, %v34
  %v1160 = vtanh.pop %v1159
  %v1161 = vmul.f32 %v1160, %v34
  %v1162 = vadd.f32 %v1161, %v35
  %v1163 = vmul.f32 %v1162, %v976
  %1165 = vrot.lane.b32.xlu0 %v1162, 64
  %v1166 = vpop.permute.xlu0 %1165
  %v1168 = vmul.f32 %v1162, %v1166
  %1170 = vrot.lane.b32.xlu0 %v1168, 32
  %v1171 = vpop.permute.xlu0 %1170
  %v1173 = vadd.f32 %v1163, %v1171
  %v1174 = vtanh.pop %v1173
  %1176 = vrot.lane.b32.xlu0 %v1174, 64
  %v1177 = vpop.permute.xlu0 %1176
  %v1179 = vmul.f32 %v1162, %v1177
  %1182 = vrot.lane.b32.xlu0 %v1082, 64
  %v1183 = vpop.permute.xlu0 %1182
  %v1185 = vsel %vm196, %v1085, %v1183
  %v1187 = vsel %vm397, %v1185, 0
  %1189 = vmatprep.subr.mxu0 0.0
  %1190 = vmatpush1.msra.mxu0 0.0
  %1191 = vmatprep.subr.mxu0 0.0
  %1192 = vmatpush1.msra.mxu0 0.0
  %1193 = vmatprep.subr.mxu0 0.0
  %1194 = vmatpush1.msra.mxu0 0.0
  %1195 = vmatprep.subr.mxu0 0.0
  %1196 = vmatpush1.msra.mxu0 0.0
  %1197 = vmatprep.subr.mxu0 0.0
  %1198 = vmatpush1.msra.mxu0 0.0
  %1199 = vmatprep.subr.mxu0 0.0
  %1200 = vmatpush1.msra.mxu0 0.0
  %1201 = vmatprep.subr.mxu0 0.0
  %1202 = vmatpush1.msra.mxu0 0.0
  %1203 = vmatprep.subr.mxu0 0.0
  %1204 = vmatpush1.msra.mxu0 0.0
  %1205 = vmatprep.subr.mxu0 0.0
  %1206 = vmatpush1.msra.mxu0 %v194
  %1207 = vmatprep.subr.mxu0 0.0
  %1208 = vmatpush1.msra.mxu0 %v193
  %1209 = vmatprep.subr.mxu0 0.0
  %1210 = vmatpush1.msra.mxu0 %v192
  %1211 = vmatprep.subr.mxu0 0.0
  %1212 = vmatpush1.msra.mxu0 %v191
  %1213 = vmatprep.subr.mxu0 0.0
  %1214 = vmatpush1.msra.mxu0 %v190
  %1215 = vmatprep.subr.mxu0 0.0
  %1216 = vmatpush1.msra.mxu0 %v189
  %1217 = vmatprep.subr.mxu0 0.0
  %1218 = vmatpush1.msra.mxu0 %v188
  %1219 = vmatprep.subr.mxu0 0.0
  %1220 = vmatpush1.msra.mxu0 %v187
  %1221 = vmatprep.subr.mxu0 0.0
  %1222 = vmatpush2.msra.mxu0 0.0
  %1223 = vmatprep.subr.mxu0 0.0
  %1224 = vmatpush2.msra.mxu0 0.0
  %1225 = vmatprep.subr.mxu0 0.0
  %1226 = vmatpush2.msra.mxu0 0.0
  %1227 = vmatprep.subr.mxu0 0.0
  %1228 = vmatpush2.msra.mxu0 0.0
  %1229 = vmatprep.subr.mxu0 0.0
  %1230 = vmatpush2.msra.mxu0 0.0
  %1231 = vmatprep.subr.mxu0 0.0
  %1232 = vmatpush2.msra.mxu0 0.0
  %1233 = vmatprep.subr.mxu0 0.0
  %1234 = vmatpush2.msra.mxu0 0.0
  %1235 = vmatprep.subr.mxu0 0.0
  %1236 = vmatpush2.msra.mxu0 0.0
  %1237 = vmatprep.subr.mxu0 0.0
  %1238 = vmatpush2.msra.mxu0 0.0
  %1239 = vmatprep.subr.mxu0 0.0
  %1240 = vmatpush2.msra.mxu0 0.0
  %1241 = vmatprep.subr.mxu0 0.0
  %1242 = vmatpush2.msra.mxu0 0.0
  %1243 = vmatprep.subr.mxu0 0.0
  %1244 = vmatpush2.msra.mxu0 0.0
  %1245 = vmatprep.subr.mxu0 0.0
  %1246 = vmatpush2.msra.mxu0 0.0
  %1247 = vmatprep.subr.mxu0 0.0
  %1248 = vmatpush2.msra.mxu0 0.0
  %1249 = vmatprep.subr.mxu0 0.0
  %1250 = vmatpush2.msra.mxu0 0.0
  %1251 = vmatprep.subr.mxu0 0.0
  %1252 = vmatpush2.msra.mxu0 0.0
  %1253 = vmatprep.mubr.f32.mxu0 0.0
  %1254 = vmatmul.mubr.f32.gmra.mxu0 %v1187
  %v1255 = vpop.f32.mrf.mxu0
  %v1256 = vadd.f32 %v395, %v1255
  %v1257 = vpop.f32.mrf.mxu0
  %1258 = vdwg.mxu0
  %v1259 = vmul.f32 %v1256, %v34
  %v1260 = vtanh.pop %v1259
  %v1261 = vmul.f32 %v1260, %v34
  %v1262 = vadd.f32 %v1261, %v35
  %v1263 = vmul.f32 %v1262, %v1076
  %1265 = vrot.lane.b32.xlu0 %v1262, 64
  %v1266 = vpop.permute.xlu0 %1265
  %v1268 = vmul.f32 %v1262, %v1266
  %1270 = vrot.lane.b32.xlu0 %v1268, 32
  %v1271 = vpop.permute.xlu0 %1270
  %v1273 = vadd.f32 %v1263, %v1271
  %v1274 = vtanh.pop %v1273
  %1276 = vrot.lane.b32.xlu0 %v1274, 64
  %v1277 = vpop.permute.xlu0 %1276
  %v1279 = vmul.f32 %v1262, %v1277
  %1281 = vrot.lane.b32.xlu0 %v1179, 32
  %v1282 = vpop.permute.xlu0 %1281
  %v1283 = vsel %vm196, %v1282, 0
  %1285 = vmatprep.subr.mxu0 0.0
  %1286 = vmatpush1.msra.mxu0 0.0
  %1287 = vmatprep.subr.mxu0 0.0
  %1288 = vmatpush1.msra.mxu0 0.0
  %1289 = vmatprep.subr.mxu0 0.0
  %1290 = vmatpush1.msra.mxu0 0.0
  %1291 = vmatprep.subr.mxu0 0.0
  %1292 = vmatpush1.msra.mxu0 0.0
  %1293 = vmatprep.subr.mxu0 0.0
  %1294 = vmatpush1.msra.mxu0 0.0
  %1295 = vmatprep.subr.mxu0 0.0
  %1296 = vmatpush1.msra.mxu0 0.0
  %1297 = vmatprep.subr.mxu0 0.0
  %1298 = vmatpush1.msra.mxu0 0.0
  %1299 = vmatprep.subr.mxu0 0.0
  %1300 = vmatpush1.msra.mxu0 0.0
  %1301 = vmatprep.subr.mxu0 0.0
  %1302 = vmatpush1.msra.mxu0 0.0
  %1303 = vmatprep.subr.mxu0 0.0
  %1304 = vmatpush1.msra.mxu0 0.0
  %1305 = vmatprep.subr.mxu0 0.0
  %1306 = vmatpush1.msra.mxu0 0.0
  %1307 = vmatprep.subr.mxu0 0.0
  %1308 = vmatpush1.msra.mxu0 0.0
  %1309 = vmatprep.subr.mxu0 0.0
  %1310 = vmatpush1.msra.mxu0 %v186
  %1311 = vmatprep.subr.mxu0 0.0
  %1312 = vmatpush1.msra.mxu0 %v185
  %1313 = vmatprep.subr.mxu0 0.0
  %1314 = vmatpush1.msra.mxu0 %v184
  %1315 = vmatprep.subr.mxu0 0.0
  %1316 = vmatpush1.msra.mxu0 %v183
  %1317 = vmatprep.subr.mxu0 0.0
  %1318 = vmatpush2.msra.mxu0 0.0
  %1319 = vmatprep.subr.mxu0 0.0
  %1320 = vmatpush2.msra.mxu0 0.0
  %1321 = vmatprep.subr.mxu0 0.0
  %1322 = vmatpush2.msra.mxu0 0.0
  %1323 = vmatprep.subr.mxu0 0.0
  %1324 = vmatpush2.msra.mxu0 0.0
  %1325 = vmatprep.subr.mxu0 0.0
  %1326 = vmatpush2.msra.mxu0 0.0
  %1327 = vmatprep.subr.mxu0 0.0
  %1328 = vmatpush2.msra.mxu0 0.0
  %1329 = vmatprep.subr.mxu0 0.0
  %1330 = vmatpush2.msra.mxu0 0.0
  %1331 = vmatprep.subr.mxu0 0.0
  %1332 = vmatpush2.msra.mxu0 0.0
  %1333 = vmatprep.subr.mxu0 0.0
  %1334 = vmatpush2.msra.mxu0 0.0
  %1335 = vmatprep.subr.mxu0 0.0
  %1336 = vmatpush2.msra.mxu0 0.0
  %1337 = vmatprep.subr.mxu0 0.0
  %1338 = vmatpush2.msra.mxu0 0.0
  %1339 = vmatprep.subr.mxu0 0.0
  %1340 = vmatpush2.msra.mxu0 0.0
  %1341 = vmatprep.subr.mxu0 0.0
  %1342 = vmatpush2.msra.mxu0 0.0
  %1343 = vmatprep.subr.mxu0 0.0
  %1344 = vmatpush2.msra.mxu0 0.0
  %1345 = vmatprep.subr.mxu0 0.0
  %1346 = vmatpush2.msra.mxu0 0.0
  %1347 = vmatprep.subr.mxu0 0.0
  %1348 = vmatpush2.msra.mxu0 0.0
  %1349 = vmatprep.mubr.f32.mxu0 0.0
  %1350 = vmatmul.mubr.f32.gmra.mxu0 %v1283
  %v1351 = vpop.f32.mrf.mxu0
  %v1352 = vadd.f32 0.0, %v1351
  %v1353 = vpop.f32.mrf.mxu0
  %1354 = vdwg.mxu0
  %v1355 = vadd.f32 %v175, %v1352
  %v1356 = vmul.f32 %v1355, %v34
  %v1357 = vtanh.pop %v1356
  %v1358 = vmul.f32 %v1357, %v34
  %v1359 = vadd.f32 %v1358, %v35
  %v1360 = vmul.f32 %v1359, %v1173
  %1362 = vrot.lane.b32.xlu0 %v1359, 64
  %v1363 = vpop.permute.xlu0 %1362
  %v1365 = vmul.f32 %v1359, %v1363
  %1367 = vrot.lane.b32.xlu0 %v1365, 32
  %v1368 = vpop.permute.xlu0 %1367
  %v1370 = vadd.f32 %v1360, %v1368
  %v1371 = vtanh.pop %v1370
  %1373 = vrot.lane.b32.xlu0 %v1371, 64
  %v1374 = vpop.permute.xlu0 %1373
  %v1376 = vmul.f32 %v1359, %v1374
  %1379 = vrot.lane.b32.xlu0 %v1279, 64
  %v1380 = vpop.permute.xlu0 %1379
  %v1382 = vsel %vm196, %v1282, %v1380
  %v1384 = vsel %vm397, %v1382, 0
  %1386 = vmatprep.subr.mxu0 0.0
  %1387 = vmatpush1.msra.mxu0 0.0
  %1388 = vmatprep.subr.mxu0 0.0
  %1389 = vmatpush1.msra.mxu0 0.0
  %1390 = vmatprep.subr.mxu0 0.0
  %1391 = vmatpush1.msra.mxu0 0.0
  %1392 = vmatprep.subr.mxu0 0.0
  %1393 = vmatpush1.msra.mxu0 0.0
  %1394 = vmatprep.subr.mxu0 0.0
  %1395 = vmatpush1.msra.mxu0 0.0
  %1396 = vmatprep.subr.mxu0 0.0
  %1397 = vmatpush1.msra.mxu0 0.0
  %1398 = vmatprep.subr.mxu0 0.0
  %1399 = vmatpush1.msra.mxu0 0.0
  %1400 = vmatprep.subr.mxu0 0.0
  %1401 = vmatpush1.msra.mxu0 0.0
  %1402 = vmatprep.subr.mxu0 0.0
  %1403 = vmatpush1.msra.mxu0 %v194
  %1404 = vmatprep.subr.mxu0 0.0
  %1405 = vmatpush1.msra.mxu0 %v193
  %1406 = vmatprep.subr.mxu0 0.0
  %1407 = vmatpush1.msra.mxu0 %v192
  %1408 = vmatprep.subr.mxu0 0.0
  %1409 = vmatpush1.msra.mxu0 %v191
  %1410 = vmatprep.subr.mxu0 0.0
  %1411 = vmatpush1.msra.mxu0 %v190
  %1412 = vmatprep.subr.mxu0 0.0
  %1413 = vmatpush1.msra.mxu0 %v189
  %1414 = vmatprep.subr.mxu0 0.0
  %1415 = vmatpush1.msra.mxu0 %v188
  %1416 = vmatprep.subr.mxu0 0.0
  %1417 = vmatpush1.msra.mxu0 %v187
  %1418 = vmatprep.subr.mxu0 0.0
  %1419 = vmatpush2.msra.mxu0 0.0
  %1420 = vmatprep.subr.mxu0 0.0
  %1421 = vmatpush2.msra.mxu0 0.0
  %1422 = vmatprep.subr.mxu0 0.0
  %1423 = vmatpush2.msra.mxu0 0.0
  %1424 = vmatprep.subr.mxu0 0.0
  %1425 = vmatpush2.msra.mxu0 0.0
  %1426 = vmatprep.subr.mxu0 0.0
  %1427 = vmatpush2.msra.mxu0 0.0
  %1428 = vmatprep.subr.mxu0 0.0
  %1429 = vmatpush2.msra.mxu0 0.0
  %1430 = vmatprep.subr.mxu0 0.0
  %1431 = vmatpush2.msra.mxu0 0.0
  %1432 = vmatprep.subr.mxu0 0.0
  %1433 = vmatpush2.msra.mxu0 0.0
  %1434 = vmatprep.subr.mxu0 0.0
  %1435 = vmatpush2.msra.mxu0 0.0
  %1436 = vmatprep.subr.mxu0 0.0
  %1437 = vmatpush2.msra.mxu0 0.0
  %1438 = vmatprep.subr.mxu0 0.0
  %1439 = vmatpush2.msra.mxu0 0.0
  %1440 = vmatprep.subr.mxu0 0.0
  %1441 = vmatpush2.msra.mxu0 0.0
  %1442 = vmatprep.subr.mxu0 0.0
  %1443 = vmatpush2.msra.mxu0 0.0
  %1444 = vmatprep.subr.mxu0 0.0
  %1445 = vmatpush2.msra.mxu0 0.0
  %1446 = vmatprep.subr.mxu0 0.0
  %1447 = vmatpush2.msra.mxu0 0.0
  %1448 = vmatprep.subr.mxu0 0.0
  %1449 = vmatpush2.msra.mxu0 0.0
  %1450 = vmatprep.mubr.f32.mxu0 0.0
  %1451 = vmatmul.mubr.f32.gmra.mxu0 %v1384
  %v1452 = vpop.f32.mrf.mxu0
  %v1453 = vadd.f32 %v395, %v1452
  %v1454 = vpop.f32.mrf.mxu0
  %1455 = vdwg.mxu0
  %v1456 = vmul.f32 %v1453, %v34
  %v1457 = vtanh.pop %v1456
  %v1458 = vmul.f32 %v1457, %v34
  %v1459 = vadd.f32 %v1458, %v35
  %v1460 = vmul.f32 %v1459, %v1273
  %1462 = vrot.lane.b32.xlu0 %v1459, 64
  %v1463 = vpop.permute.xlu0 %1462
  %v1465 = vmul.f32 %v1459, %v1463
  %1467 = vrot.lane.b32.xlu0 %v1465, 32
  %v1468 = vpop.permute.xlu0 %1467
  %v1470 = vadd.f32 %v1460, %v1468
  %v1471 = vtanh.pop %v1470
  %1473 = vrot.lane.b32.xlu0 %v1471, 64
  %v1474 = vpop.permute.xlu0 %1473
  %v1476 = vmul.f32 %v1459, %v1474
  %1478 = vrot.lane.b32.xlu0 %v1376, 32
  %v1479 = vpop.permute.xlu0 %1478
  %v1480 = vsel %vm196, %v1479, 0
  %1482 = vmatprep.subr.mxu0 0.0
  %1483 = vmatpush1.msra.mxu0 0.0
  %1484 = vmatprep.subr.mxu0 0.0
  %1485 = vmatpush1.msra.mxu0 0.0
  %1486 = vmatprep.subr.mxu0 0.0
  %1487 = vmatpush1.msra.mxu0 0.0
  %1488 = vmatprep.subr.mxu0 0.0
  %1489 = vmatpush1.msra.mxu0 0.0
  %1490 = vmatprep.subr.mxu0 0.0
  %1491 = vmatpush1.msra.mxu0 0.0
  %1492 = vmatprep.subr.mxu0 0.0
  %1493 = vmatpush1.msra.mxu0 0.0
  %1494 = vmatprep.subr.mxu0 0.0
  %1495 = vmatpush1.msra.mxu0 0.0
  %1496 = vmatprep.subr.mxu0 0.0
  %1497 = vmatpush1.msra.mxu0 0.0
  %1498 = vmatprep.subr.mxu0 0.0
  %1499 = vmatpush1.msra.mxu0 0.0
  %1500 = vmatprep.subr.mxu0 0.0
  %1501 = vmatpush1.msra.mxu0 0.0
  %1502 = vmatprep.subr.mxu0 0.0
  %1503 = vmatpush1.msra.mxu0 0.0
  %1504 = vmatprep.subr.mxu0 0.0
  %1505 = vmatpush1.msra.mxu0 0.0
  %1506 = vmatprep.subr.mxu0 0.0
  %1507 = vmatpush1.msra.mxu0 %v186
  %1508 = vmatprep.subr.mxu0 0.0
  %1509 = vmatpush1.msra.mxu0 %v185
  %1510 = vmatprep.subr.mxu0 0.0
  %1511 = vmatpush1.msra.mxu0 %v184
  %1512 = vmatprep.subr.mxu0 0.0
  %1513 = vmatpush1.msra.mxu0 %v183
  %1514 = vmatprep.subr.mxu0 0.0
  %1515 = vmatpush2.msra.mxu0 0.0
  %1516 = vmatprep.subr.mxu0 0.0
  %1517 = vmatpush2.msra.mxu0 0.0
  %1518 = vmatprep.subr.mxu0 0.0
  %1519 = vmatpush2.msra.mxu0 0.0
  %1520 = vmatprep.subr.mxu0 0.0
  %1521 = vmatpush2.msra.mxu0 0.0
  %1522 = vmatprep.subr.mxu0 0.0
  %1523 = vmatpush2.msra.mxu0 0.0
  %1524 = vmatprep.subr.mxu0 0.0
  %1525 = vmatpush2.msra.mxu0 0.0
  %1526 = vmatprep.subr.mxu0 0.0
  %1527 = vmatpush2.msra.mxu0 0.0
  %1528 = vmatprep.subr.mxu0 0.0
  %1529 = vmatpush2.msra.mxu0 0.0
  %1530 = vmatprep.subr.mxu0 0.0
  %1531 = vmatpush2.msra.mxu0 0.0
  %1532 = vmatprep.subr.mxu0 0.0
  %1533 = vmatpush2.msra.mxu0 0.0
  %1534 = vmatprep.subr.mxu0 0.0
  %1535 = vmatpush2.msra.mxu0 0.0
  %1536 = vmatprep.subr.mxu0 0.0
  %1537 = vmatpush2.msra.mxu0 0.0
  %1538 = vmatprep.subr.mxu0 0.0
  %1539 = vmatpush2.msra.mxu0 0.0
  %1540 = vmatprep.subr.mxu0 0.0
  %1541 = vmatpush2.msra.mxu0 0.0
  %1542 = vmatprep.subr.mxu0 0.0
  %1543 = vmatpush2.msra.mxu0 0.0
  %1544 = vmatprep.subr.mxu0 0.0
  %1545 = vmatpush2.msra.mxu0 0.0
  %1546 = vmatprep.mubr.f32.mxu0 0.0
  %1547 = vmatmul.mubr.f32.gmra.mxu0 %v1480
  %v1548 = vpop.f32.mrf.mxu0
  %v1549 = vadd.f32 0.0, %v1548
  %v1550 = vpop.f32.mrf.mxu0
  %1551 = vdwg.mxu0
  %v1552 = vadd.f32 %v180, %v1549
  %v1553 = vmul.f32 %v1552, %v34
  %v1554 = vtanh.pop %v1553
  %v1555 = vmul.f32 %v1554, %v34
  %v1556 = vadd.f32 %v1555, %v35
  %v1557 = vmul.f32 %v1556, %v1370
  %1559 = vrot.lane.b32.xlu0 %v1556, 64
  %v1560 = vpop.permute.xlu0 %1559
  %v1562 = vmul.f32 %v1556, %v1560
  %1564 = vrot.lane.b32.xlu0 %v1562, 32
  %v1565 = vpop.permute.xlu0 %1564
  %v1567 = vadd.f32 %v1557, %v1565
  %v1568 = vtanh.pop %v1567
  %1570 = vrot.lane.b32.xlu0 %v1568, 64
  %v1571 = vpop.permute.xlu0 %1570
  %v1573 = vmul.f32 %v1556, %v1571
  %1576 = vrot.lane.b32.xlu0 %v1476, 64
  %v1577 = vpop.permute.xlu0 %1576
  %v1579 = vsel %vm196, %v1479, %v1577
  %v1581 = vsel %vm397, %v1579, 0
  %1583 = vmatprep.subr.mxu0 0.0
  %1584 = vmatpush1.msra.mxu0 0.0
  %1585 = vmatprep.subr.mxu0 0.0
  %1586 = vmatpush1.msra.mxu0 0.0
  %1587 = vmatprep.subr.mxu0 0.0
  %1588 = vmatpush1.msra.mxu0 0.0
  %1589 = vmatprep.subr.mxu0 0.0
  %1590 = vmatpush1.msra.mxu0 0.0
  %1591 = vmatprep.subr.mxu0 0.0
  %1592 = vmatpush1.msra.mxu0 0.0
  %1593 = vmatprep.subr.mxu0 0.0
  %1594 = vmatpush1.msra.mxu0 0.0
  %1595 = vmatprep.subr.mxu0 0.0
  %1596 = vmatpush1.msra.mxu0 0.0
  %1597 = vmatprep.subr.mxu0 0.0
  %1598 = vmatpush1.msra.mxu0 0.0
  %1599 = vmatprep.subr.mxu0 0.0
  %1600 = vmatpush1.msra.mxu0 %v194
  %1601 = vmatprep.subr.mxu0 0.0
  %1602 = vmatpush1.msra.mxu0 %v193
  %1603 = vmatprep.subr.mxu0 0.0
  %1604 = vmatpush1.msra.mxu0 %v192
  %1605 = vmatprep.subr.mxu0 0.0
  %1606 = vmatpush1.msra.mxu0 %v191
  %1607 = vmatprep.subr.mxu0 0.0
  %1608 = vmatpush1.msra.mxu0 %v190
  %1609 = vmatprep.subr.mxu0 0.0
  %1610 = vmatpush1.msra.mxu0 %v189
  %1611 = vmatprep.subr.mxu0 0.0
  %1612 = vmatpush1.msra.mxu0 %v188
  %1613 = vmatprep.subr.mxu0 0.0
  %1614 = vmatpush1.msra.mxu0 %v187
  %1615 = vmatprep.subr.mxu0 0.0
  %1616 = vmatpush2.msra.mxu0 0.0
  %1617 = vmatprep.subr.mxu0 0.0
  %1618 = vmatpush2.msra.mxu0 0.0
  %1619 = vmatprep.subr.mxu0 0.0
  %1620 = vmatpush2.msra.mxu0 0.0
  %1621 = vmatprep.subr.mxu0 0.0
  %1622 = vmatpush2.msra.mxu0 0.0
  %1623 = vmatprep.subr.mxu0 0.0
  %1624 = vmatpush2.msra.mxu0 0.0
  %1625 = vmatprep.subr.mxu0 0.0
  %1626 = vmatpush2.msra.mxu0 0.0
  %1627 = vmatprep.subr.mxu0 0.0
  %1628 = vmatpush2.msra.mxu0 0.0
  %1629 = vmatprep.subr.mxu0 0.0
  %1630 = vmatpush2.msra.mxu0 0.0
  %1631 = vmatprep.subr.mxu0 0.0
  %1632 = vmatpush2.msra.mxu0 0.0
  %1633 = vmatprep.subr.mxu0 0.0
  %1634 = vmatpush2.msra.mxu0 0.0
  %1635 = vmatprep.subr.mxu0 0.0
  %1636 = vmatpush2.msra.mxu0 0.0
  %1637 = vmatprep.subr.mxu0 0.0
  %1638 = vmatpush2.msra.mxu0 0.0
  %1639 = vmatprep.subr.mxu0 0.0
  %1640 = vmatpush2.msra.mxu0 0.0
  %1641 = vmatprep.subr.mxu0 0.0
  %1642 = vmatpush2.msra.mxu0 0.0
  %1643 = vmatprep.subr.mxu0 0.0
  %1644 = vmatpush2.msra.mxu0 0.0
  %1645 = vmatprep.subr.mxu0 0.0
  %1646 = vmatpush2.msra.mxu0 0.0
  %1647 = vmatprep.mubr.f32.mxu0 0.0
  %1648 = vmatmul.mubr.f32.gmra.mxu0 %v1581
  %v1649 = vpop.f32.mrf.mxu0
  %v1650 = vadd.f32 %v395, %v1649
  %v1651 = vpop.f32.mrf.mxu0
  %1652 = vdwg.mxu0
  %v1653 = vmul.f32 %v1650, %v34
  %v1654 = vtanh.pop %v1653
  %v1655 = vmul.f32 %v1654, %v34
  %v1656 = vadd.f32 %v1655, %v35
  %v1657 = vmul.f32 %v1656, %v1470
  %1659 = vrot.lane.b32.xlu0 %v1656, 64
  %v1660 = vpop.permute.xlu0 %1659
  %v1662 = vmul.f32 %v1656, %v1660
  %1664 = vrot.lane.b32.xlu0 %v1662, 32
  %v1665 = vpop.permute.xlu0 %1664
  %v1667 = vadd.f32 %v1657, %v1665
  %v1668 = vtanh.pop %v1667
  %1670 = vrot.lane.b32.xlu0 %v1668, 64
  %v1671 = vpop.permute.xlu0 %1670
  %v1673 = vmul.f32 %v1656, %v1671
  %1675 = vrot.lane.b32.xlu0 %v1573, 32
  %v1676 = vpop.permute.xlu0 %1675
  %1679 = vrot.lane.b32.xlu0 %v1673, 64
  %v1680 = vpop.permute.xlu0 %1679
  %v1682 = vsel %vm196, %v1676, %v1680
  %v1684 = vsel %vm397, %v1682, 0
  %1686 = vmatprep.subr.mxu0 0.0
  %1687 = vmatpush1.msra.mxu0 0.0
  %1688 = vmatprep.subr.mxu0 0.0
  %1689 = vmatpush1.msra.mxu0 0.0
  %1690 = vmatprep.subr.mxu0 0.0
  %1691 = vmatpush1.msra.mxu0 0.0
  %1692 = vmatprep.subr.mxu0 0.0
  %1693 = vmatpush1.msra.mxu0 0.0
  %1694 = vmatprep.subr.mxu0 0.0
  %1695 = vmatpush1.msra.mxu0 0.0
  %1696 = vmatprep.subr.mxu0 0.0
  %1697 = vmatpush1.msra.mxu0 0.0
  %1698 = vmatprep.subr.mxu0 0.0
  %1699 = vmatpush1.msra.mxu0 0.0
  %1700 = vmatprep.subr.mxu0 0.0
  %1701 = vmatpush1.msra.mxu0 0.0
  %1702 = vmatprep.subr.mxu0 0.0
  %1703 = vmatpush1.msra.mxu0 %v194
  %1704 = vmatprep.subr.mxu0 0.0
  %1705 = vmatpush1.msra.mxu0 %v193
  %1706 = vmatprep.subr.mxu0 0.0
  %1707 = vmatpush1.msra.mxu0 %v192
  %1708 = vmatprep.subr.mxu0 0.0
  %1709 = vmatpush1.msra.mxu0 %v191
  %1710 = vmatprep.subr.mxu0 0.0
  %1711 = vmatpush1.msra.mxu0 %v190
  %1712 = vmatprep.subr.mxu0 0.0
  %1713 = vmatpush1.msra.mxu0 %v189
  %1714 = vmatprep.subr.mxu0 0.0
  %1715 = vmatpush1.msra.mxu0 %v188
  %1716 = vmatprep.subr.mxu0 0.0
  %1717 = vmatpush1.msra.mxu0 %v187
  %1718 = vmatprep.subr.mxu0 0.0
  %1719 = vmatpush2.msra.mxu0 0.0
  %1720 = vmatprep.subr.mxu0 0.0
  %1721 = vmatpush2.msra.mxu0 0.0
  %1722 = vmatprep.subr.mxu0 0.0
  %1723 = vmatpush2.msra.mxu0 0.0
  %1724 = vmatprep.subr.mxu0 0.0
  %1725 = vmatpush2.msra.mxu0 0.0
  %1726 = vmatprep.subr.mxu0 0.0
  %1727 = vmatpush2.msra.mxu0 0.0
  %1728 = vmatprep.subr.mxu0 0.0
  %1729 = vmatpush2.msra.mxu0 0.0
  %1730 = vmatprep.subr.mxu0 0.0
  %1731 = vmatpush2.msra.mxu0 0.0
  %1732 = vmatprep.subr.mxu0 0.0
  %1733 = vmatpush2.msra.mxu0 0.0
  %1734 = vmatprep.subr.mxu0 0.0
  %1735 = vmatpush2.msra.mxu0 0.0
  %1736 = vmatprep.subr.mxu0 0.0
  %1737 = vmatpush2.msra.mxu0 0.0
  %1738 = vmatprep.subr.mxu0 0.0
  %1739 = vmatpush2.msra.mxu0 0.0
  %1740 = vmatprep.subr.mxu0 0.0
  %1741 = vmatpush2.msra.mxu0 0.0
  %1742 = vmatprep.subr.mxu0 0.0
  %1743 = vmatpush2.msra.mxu0 0.0
  %1744 = vmatprep.subr.mxu0 0.0
  %1745 = vmatpush2.msra.mxu0 0.0
  %1746 = vmatprep.subr.mxu0 0.0
  %1747 = vmatpush2.msra.mxu0 0.0
  %1748 = vmatprep.subr.mxu0 0.0
  %1749 = vmatpush2.msra.mxu0 0.0
  %1750 = vmatprep.mubr.f32.mxu0 0.0
  %1751 = vmatmul.mubr.f32.gmra.mxu0 %v1684
  %v1752 = vpop.f32.mrf.mxu0
  %v1753 = vadd.f32 %v395, %v1752
  %v1754 = vpop.f32.mrf.mxu0
  %1755 = vdwg.mxu0
  %v1756 = vmul.f32 %v1753, %v34
  %v1757 = vtanh.pop %v1756
  %v1758 = vmul.f32 %v1757, %v34
  %v1759 = vadd.f32 %v1758, %v35
  %v1760 = vmul.f32 %v1759, %v1667
  %1762 = vrot.lane.b32.xlu0 %v1759, 64
  %v1763 = vpop.permute.xlu0 %1762
  %v1765 = vmul.f32 %v1759, %v1763
  %1767 = vrot.lane.b32.xlu0 %v1765, 32
  %v1768 = vpop.permute.xlu0 %1767
  %v1770 = vadd.f32 %v1760, %v1768
  %v1771 = vtanh.pop %v1770
  %1773 = vrot.lane.b32.xlu0 %v1771, 64
  %v1774 = vpop.permute.xlu0 %1773
  %v1776 = vmul.f32 %v1759, %v1774
  %v1777 = vld [vmem:[%s6] sm:$0xff]
  %v1778 = vld [vmem:[%s6 + $0x8] sm:$0xff]
  %v1779 = vld [vmem:[%s6 + $0x10] sm:$0xff]
  %v1780 = vld [vmem:[%s6 + $0x18] sm:$0xff]
  %v1781 = vld [vmem:[%s7] sm:$0x1]
  %v1783 = vlaneseq
  %v1784 = vshrl.u32 %v1783, 7
  %v1785 = vsub.s32 0, %v1784
  %v1786 = vrot.slane %v1781, %v1785
  %1789 = vrot.lane.b32.xlu0 %v1776, 32
  %v1790 = vpop.permute.xlu0 %1789
  %v1791 = vsel %vm196, %v1790, 0
  %1793 = vmatprep.subr.mxu0 0.0
  %1794 = vmatpush1.msra.mxu0 0.0
  %1795 = vmatprep.subr.mxu0 0.0
  %1796 = vmatpush1.msra.mxu0 0.0
  %1797 = vmatprep.subr.mxu0 0.0
  %1798 = vmatpush1.msra.mxu0 0.0
  %1799 = vmatprep.subr.mxu0 0.0
  %1800 = vmatpush1.msra.mxu0 0.0
  %1801 = vmatprep.subr.mxu0 0.0
  %1802 = vmatpush1.msra.mxu0 0.0
  %1803 = vmatprep.subr.mxu0 0.0
  %1804 = vmatpush1.msra.mxu0 0.0
  %1805 = vmatprep.subr.mxu0 0.0
  %1806 = vmatpush1.msra.mxu0 0.0
  %1807 = vmatprep.subr.mxu0 0.0
  %1808 = vmatpush1.msra.mxu0 0.0
  %1809 = vmatprep.subr.mxu0 0.0
  %1810 = vmatpush1.msra.mxu0 0.0
  %1811 = vmatprep.subr.mxu0 0.0
  %1812 = vmatpush1.msra.mxu0 0.0
  %1813 = vmatprep.subr.mxu0 0.0
  %1814 = vmatpush1.msra.mxu0 0.0
  %1815 = vmatprep.subr.mxu0 0.0
  %1816 = vmatpush1.msra.mxu0 0.0
  %1817 = vmatprep.subr.mxu0 0.0
  %1818 = vmatpush1.msra.mxu0 %v1780
  %1819 = vmatprep.subr.mxu0 0.0
  %1820 = vmatpush1.msra.mxu0 %v1779
  %1821 = vmatprep.subr.mxu0 0.0
  %1822 = vmatpush1.msra.mxu0 %v1778
  %1823 = vmatprep.subr.mxu0 0.0
  %1824 = vmatpush1.msra.mxu0 %v1777
  %1825 = vmatprep.subr.mxu0 0.0
  %1826 = vmatpush2.msra.mxu0 0.0
  %1827 = vmatprep.subr.mxu0 0.0
  %1828 = vmatpush2.msra.mxu0 0.0
  %1829 = vmatprep.subr.mxu0 0.0
  %1830 = vmatpush2.msra.mxu0 0.0
  %1831 = vmatprep.subr.mxu0 0.0
  %1832 = vmatpush2.msra.mxu0 0.0
  %1833 = vmatprep.subr.mxu0 0.0
  %1834 = vmatpush2.msra.mxu0 0.0
  %1835 = vmatprep.subr.mxu0 0.0
  %1836 = vmatpush2.msra.mxu0 0.0
  %1837 = vmatprep.subr.mxu0 0.0
  %1838 = vmatpush2.msra.mxu0 0.0
  %1839 = vmatprep.subr.mxu0 0.0
  %1840 = vmatpush2.msra.mxu0 0.0
  %1841 = vmatprep.subr.mxu0 0.0
  %1842 = vmatpush2.msra.mxu0 0.0
  %1843 = vmatprep.subr.mxu0 0.0
  %1844 = vmatpush2.msra.mxu0 0.0
  %1845 = vmatprep.subr.mxu0 0.0
  %1846 = vmatpush2.msra.mxu0 0.0
  %1847 = vmatprep.subr.mxu0 0.0
  %1848 = vmatpush2.msra.mxu0 0.0
  %1849 = vmatprep.subr.mxu0 0.0
  %1850 = vmatpush2.msra.mxu0 0.0
  %1851 = vmatprep.subr.mxu0 0.0
  %1852 = vmatpush2.msra.mxu0 0.0
  %1853 = vmatprep.subr.mxu0 0.0
  %1854 = vmatpush2.msra.mxu0 0.0
  %1855 = vmatprep.subr.mxu0 0.0
  %1856 = vmatpush2.msra.mxu0 0.0
  %1857 = vmatprep.mubr.f32.mxu0 0.0
  %1858 = vmatmul.mubr.f32.gmra.mxu0 %v1791
  %v1859 = vpop.f32.mrf.mxu0
  %v1860 = vadd.f32 %v1786, %v1859
  %v1861 = vpop.f32.mrf.mxu0
  %1862 = vdwg.mxu0
  %vm1863 = vcmask 64512
  %1864 = vst.msk [vmem:[%s8] sm:$0xff] %vm1863, %v1860
  // Predicated region
  $region34: #{lstm_forward.1} parent=0 // pred_check
    _
  $region35: #{lstm_forward.1} parent=0 // pred_check_branch
    %1866 = sbr.rel (0) target = $region37
  $region36: #{lstm_forward.1} parent=0 // pred_region
    _
  $region37: #{lstm_forward.1} parent=0 // pred_fallthru
    _
  // Predicated region
  $region38: #{lstm_forward.1} parent=0 // pred_check
    _
  $region39: #{lstm_forward.1} parent=0 // pred_check_branch
    %1868 = sbr.rel (0) target = $region41
  $region40: #{lstm_forward.1} parent=0 // pred_region
    _
  $region41: #{lstm_forward.1} parent=0 // pred_fallthru
    _

</llo_original>
